<compile_context>
chip_gen: v7x
topology: tpu7x:2x2x1
jax: 0.10.0
libtpu: 0.0.40
codegen_flags: <defaults>
</compile_context>

<pallas_src>
import functools
import math

import jax
import jax.numpy as jnp
from jax.experimental import pallas as pl
from jax.experimental.pallas import tpu as pltpu


def _shift_left(x, s, length):
    """Circular left shift along lanes: out[..., p] = x[..., (p + s) % length]."""
    if s == 0:
        return x
    return pltpu.roll(x, shift=(length - s) % length, axis=1)


def _conv3x3_kernel(x_ref, up_ref, dn_ref, w_ref, m_ref, o_ref, *,
                    tile_h, W, buf_len):
    """One (batch, H-tile, Cout-block) grid step.

    x_ref : (1, cin_p, tile_h*W)     flattened image rows of this tile
    up_ref: (1, cin_p, halo_h*W)     block whose LAST row is image row above tile
    dn_ref: (1, cin_p, halo_h*W)     block whose FIRST row is image row below tile
    w_ref : (9, cout_blk, cin_p)     conv taps, (kh,kw)-major leading axis
    m_ref : (2, buf_len)             keep_l / keep_r W-periodic border masks
    o_ref : (1, cout_blk, tile_h*W)  lane-dense output store
    """
    i = pl.program_id(1)
    n_t = pl.num_programs(1)
    thw = tile_h * W

    mid = x_ref[0]                                  # (cin_p, thw)
    dt = mid.dtype
    cin_p = mid.shape[0]
    halo_elems = up_ref.shape[2]

    # Halo rows, zeroed at the image top / bottom border.
    top = up_ref[0, :, halo_elems - W:halo_elems] * (i > 0).astype(dt)   # (cin_p, W)
    bot = dn_ref[0, :, 0:W] * (i < n_t - 1).astype(dt)                   # (cin_p, W)

    # Rows [-1 .. tile_h] flattened; zero tail pads the lane dim to buf_len
    # (a multiple of 128) so all rolls operate on cleanly tiled vregs.
    parts = [top, mid, bot]
    tail = buf_len - (thw + 2 * W)
    if tail:
        parts.append(jnp.zeros((cin_p, tail), dtype=dt))
    buf = jnp.concatenate(parts, axis=1)            # (cin_p, buf_len)

    keep_l = m_ref[0:1, :]                          # (1, buf_len): col != 0
    keep_r = m_ref[1:2, :]                          # (1, buf_len): col != W-1

    # kw-shifted full-height buffers (XLU rolls); masks kill the wrapped lanes
    # (which are exactly the left/right image-border taps).
    c0 = buf
    l0 = pltpu.roll(buf, shift=1, axis=1) * keep_l          # value at w-1 (kw=0 tap)
    r0 = _shift_left(buf, 1, buf_len) * keep_r              # value at w+1 (kw=2 tap)

    cout_blk = w_ref.shape[1]
    acc = jnp.zeros((cout_blk, thw), dtype=jnp.float32)
    for kh in range(3):
        s = kh * W                                          # row shift via XLU roll
        lk = _shift_left(l0, s, buf_len)[:, :thw]
        ck = _shift_left(c0, s, buf_len)[:, :thw]
        rk = _shift_left(r0, s, buf_len)[:, :thw]
        acc = acc + jnp.dot(w_ref[3 * kh + 0], lk, preferred_element_type=jnp.float32)
        acc = acc + jnp.dot(w_ref[3 * kh + 1], ck, preferred_element_type=jnp.float32)
        acc = acc + jnp.dot(w_ref[3 * kh + 2], rk, preferred_element_type=jnp.float32)

    o_ref[0] = acc.astype(o_ref.dtype)


def _vmem_capacity_bytes():
    try:
        return int(pltpu.get_tpu_info().vmem_capacity_bytes)
    except Exception:
        return 64 * 1024 * 1024       # conservative (v7x-sized) fallback


def overlap_patch_embed(x_nchw, weight_oihw):
    """Forward pass of OverlapPatchEmbed (Conv2d k=3, s=1, p=1, bias=False).

    x_nchw:      (B, Cin, H, W)      -- PyTorch convention
    weight_oihw: (Cout, Cin, 3, 3)   -- nn.Conv2d.weight layout
    returns:     (B, Cout, H, W)
    """
    B, Cin, H, W = x_nchw.shape
    Cout = weight_oihw.shape[0]
    dtype = x_nchw.dtype
    itemsize = jnp.dtype(dtype).itemsize

    # Sublane-multiple channel padding (8 for f32, 16 for bf16, 32 for int8).
    cin_mult = {4: 8, 2: 16, 1: 32}.get(itemsize, 8)
    cin_p = ((Cin + cin_mult - 1) // cin_mult) * cin_mult

    # Zero-pad W to a multiple of 16 and H to a multiple of 8 so a tiny
    # (<= 8 row) 128-lane-aligned halo block always exists.  Zero padding keeps
    # the conv's zero-pad semantics at the real borders; padded rows/cols are
    # sliced off at the end.
    W_p = ((W + 15) // 16) * 16
    H_p = ((H + 7) // 8) * 8

    x_p = x_nchw
    if (cin_p, H_p, W_p) != (Cin, H, W):
        x_p = jnp.pad(x_nchw, ((0, 0), (0, cin_p - Cin), (0, H_p - H), (0, W_p - W)))
    x_flat = x_p.reshape(B, cin_p, H_p * W_p)     # free, contiguity-preserving

    # (Cout, Cin, 3, 3) -> (9, Cout, cin_p), (kh, kw)-major leading axis.
    w9 = jnp.transpose(weight_oihw, (2, 3, 0, 1)).reshape(9, Cout, Cin)
    if cin_p != Cin:
        w9 = jnp.pad(w9, ((0, 0), (0, 0), (0, cin_p - Cin)))
    w9 = w9.astype(dtype)

    # ---- tiling -------------------------------------------------------------
    halo_h = 128 // math.gcd(W_p, 128)            # in {1,2,4,8}; divides H_p
    cands = [t for t in range(halo_h, H_p + 1, halo_h) if H_p % t == 0]

    vmem_cap = _vmem_capacity_bytes()
    budget = int(vmem_cap * 0.4)
    target_lanes = 2048                           # pipeline plateau; don't oversize

    def footprint(th):
        thw_ = th * W_p
        L_ = ((thw_ + 2 * W_p + 127) // 128) * 128
        blocks = itemsize * (cin_p * thw_ + 2 * cin_p * halo_h * W_p
                             + 9 * Cout * cin_p + 2 * L_ + Cout * thw_)
        temps = (itemsize * cin_p * L_ * 8          # buf + shifted copies
                 + 4 * Cout * thw_ * 2              # f32 accumulator + slack
                 + itemsize * 3 * cin_p * thw_)     # live plane slices
        return 2 * blocks + temps                   # double-buffered blocks

    tile_h = cands[0]
    for t in cands:
        if footprint(t) <= budget:
            tile_h = t
            if t * W_p >= target_lanes:
                break
        else:
            break

    thw = tile_h * W_p
    n_t = H_p // tile_h
    r = tile_h // halo_h
    n_halo = H_p // halo_h
    buf_len = ((thw + 2 * W_p + 127) // 128) * 128

    # Optional Cout split so a tiny grid still feeds both v7x TensorCores.
    n_co = 2 if (B * n_t < 4 and Cout % 16 == 0) else 1
    cout_blk = Cout // n_co

    # Resident W-periodic border masks (hoisted out of the kernel body).
    col = jnp.arange(buf_len, dtype=jnp.int32) % W_p
    masks = jnp.stack([(col != 0), (col != W_p - 1)]).astype(dtype)   # (2, buf_len)

    kernel = functools.partial(_conv3x3_kernel, tile_h=tile_h, W=W_p, buf_len=buf_len)

    flops = 2 * B * H_p * W_p * 9 * cin_p * Cout
    bytes_accessed = itemsize * (
        B * cin_p * H_p * W_p                        # main input stream
        + 2 * B * n_t * cin_p * halo_h * W_p         # halo re-reads
        + 9 * Cout * cin_p + 2 * buf_len             # weights + masks
        + B * Cout * H_p * W_p)                      # output
    vmem_limit = int(min(vmem_cap * 0.9,
                         max(2 * footprint(tile_h), 24 * 1024 * 1024)))

    out_flat = pl.pallas_call(
        kernel,
        out_shape=jax.ShapeDtypeStruct((B, Cout, H_p * W_p), dtype),
        grid_spec=pltpu.PrefetchScalarGridSpec(
            num_scalar_prefetch=0,
            grid=(B, n_t, n_co),
            in_specs=[
                # main tile
                pl.BlockSpec((1, cin_p, thw), lambda b, i, c: (b, 0, i)),
                # small block just above the tile (its last row is the top halo)
                pl.BlockSpec((1, cin_p, halo_h * W_p),
                             lambda b, i, c: (b, 0, jnp.maximum(i * r - 1, 0))),
                # small block just below the tile (its first row is the bottom halo)
                pl.BlockSpec((1, cin_p, halo_h * W_p),
                             lambda b, i, c: (b, 0, jnp.minimum((i + 1) * r, n_halo - 1))),
                # conv taps for this Cout block (tiny, resident)
                pl.BlockSpec((9, cout_blk, cin_p), lambda b, i, c: (0, c, 0)),
                # border masks (tiny, resident)
                pl.BlockSpec((2, buf_len), lambda b, i, c: (0, 0)),
            ],
            out_specs=pl.BlockSpec((1, cout_blk, thw), lambda b, i, c: (b, c, i)),
        ),
        compiler_params=pltpu.CompilerParams(
            dimension_semantics=("parallel", "parallel", "parallel"),
            vmem_limit_bytes=vmem_limit),
        cost_estimate=pl.CostEstimate(
            flops=flops, transcendentals=0, bytes_accessed=bytes_accessed),
    )(x_flat, x_flat, x_flat, w9, masks)

    out = out_flat.reshape(B, Cout, H_p, W_p)
    if (H_p, W_p) != (H, W):
        out = out[:, :, :H, :W]
    return out


if __name__ == "__main__":
    key = jax.random.PRNGKey(0)
    k_x, k_w = jax.random.split(key)

    B, Cin, H, W = 2, 4, 16, 16
    Cout = 32  # embed_dim

    x = jax.random.normal(k_x, (B, Cin, H, W), dtype=jnp.float32)
    weight = jax.random.normal(k_w, (Cout, Cin, 3, 3), dtype=jnp.float32) * 0.1

    out = overlap_patch_embed(x, weight)
    out = jax.block_until_ready(out)

    # Sanity check vs. XLA's conv (same semantics as the PyTorch module).
    ref = jax.lax.conv_general_dilated(
        x, weight, window_strides=(1, 1), padding=((1, 1), (1, 1)),
        dimension_numbers=("NCHW", "OIHW", "NCHW"))
    assert out.shape == (B, Cout, H, W)
    assert jnp.allclose(out, ref, atol=1e-4, rtol=1e-4)

    print("KERNEL_OK")
</pallas_src>

<mosaic_0001>
module attributes {stable_mosaic.version = 11 : i64} {
  func.func @_conv3x3_kernel(%arg0: i32, %arg1: i32, %arg2: i32, %arg3: memref<1x8x256xf32, #tpu.memory_space<vmem>>, %arg4: memref<1x8x128xf32, #tpu.memory_space<vmem>>, %arg5: memref<1x8x128xf32, #tpu.memory_space<vmem>>, %arg6: memref<9x16x8xf32, #tpu.memory_space<vmem>>, %arg7: memref<2x384xf32, #tpu.memory_space<vmem>>, %arg8: memref<1x16x256xf32, #tpu.memory_space<vmem>>) attributes {dimension_semantics = [#tpu.dimension_semantics<parallel>, #tpu.dimension_semantics<parallel>, #tpu.dimension_semantics<parallel>], iteration_bounds = array<i64: 2, 1, 2>, scalar_prefetch = 0 : i64, scratch_operands = 0 : i64, tpu.core_type = #tpu.core_type<tc>, window_params = [{transform_indices = @transform_0, window_bounds = array<i64: 1, 8, 256>}, {transform_indices = @transform_1, window_bounds = array<i64: 1, 8, 128>}, {transform_indices = @transform_2, window_bounds = array<i64: 1, 8, 128>}, {transform_indices = @transform_3, window_bounds = array<i64: 9, 16, 8>}, {pipeline_mode = #tpu.pipeline_mode<synchronous>, transform_indices = @transform_4, window_bounds = array<i64: 2, 384>}, {transform_indices = @transform_5, window_bounds = array<i64: 1, 16, 256>}]} {
    %c0 = arith.constant 0 : index
    %c0_0 = arith.constant 0 : index
    %c0_1 = arith.constant 0 : index
    %0 = vector.load %arg3[%c0, %c0_0, %c0_1] : memref<1x8x256xf32, #tpu.memory_space<vmem>>, vector<1x8x256xf32>
    %1 = vector.shape_cast %0 : vector<1x8x256xf32> to vector<8x256xf32>
    %c0_2 = arith.constant 0 : index
    %c0_3 = arith.constant 0 : index
    %c112 = arith.constant 112 : index
    %2 = vector.load %arg4[%c0_2, %c0_3, %c112] : memref<1x8x128xf32, #tpu.memory_space<vmem>>, vector<1x8x16xf32>
    %3 = vector.shape_cast %2 : vector<1x8x16xf32> to vector<8x16xf32>
    %c0_i32 = arith.constant 0 : i32
    %4 = arith.cmpi sgt, %arg1, %c0_i32 : i32
    %5 = arith.extui %4 : i1 to i32
    %6 = arith.sitofp %5 : i32 to f32
    %7 = vector.broadcast %6 : f32 to vector<8x16xf32>
    %8 = arith.mulf %3, %7 : vector<8x16xf32>
    %c0_4 = arith.constant 0 : index
    %c0_5 = arith.constant 0 : index
    %c0_6 = arith.constant 0 : index
    %9 = vector.load %arg5[%c0_4, %c0_5, %c0_6] : memref<1x8x128xf32, #tpu.memory_space<vmem>>, vector<1x8x16xf32>
    %10 = vector.shape_cast %9 : vector<1x8x16xf32> to vector<8x16xf32>
    %c0_i32_7 = arith.constant 0 : i32
    %11 = arith.cmpi slt, %arg1, %c0_i32_7 : i32
    %12 = arith.extui %11 : i1 to i32
    %13 = arith.sitofp %12 : i32 to f32
    %14 = vector.broadcast %13 : f32 to vector<8x16xf32>
    %15 = arith.mulf %10, %14 : vector<8x16xf32>
    %cst = arith.constant 0.000000e+00 : f32
    %16 = vector.broadcast %cst : f32 to vector<8x96xf32>
    %17 = tpu.concatenate %8, %1, %15, %16 in 1 : vector<8x16xf32>, vector<8x256xf32>, vector<8x16xf32>, vector<8x96xf32> -> vector<8x384xf32>
    %c0_8 = arith.constant 0 : index
    %c0_9 = arith.constant 0 : index
    %18 = vector.load %arg7[%c0_8, %c0_9] : memref<2x384xf32, #tpu.memory_space<vmem>>, vector<1x384xf32>
    %c1 = arith.constant 1 : index
    %c0_10 = arith.constant 0 : index
    %19 = vector.load %arg7[%c1, %c0_10] : memref<2x384xf32, #tpu.memory_space<vmem>>, vector<1x384xf32>
    %c1_i32 = arith.constant 1 : i32
    %20 = tpu.dynamic_rotate %17 by %c1_i32 dim 1 : vector<8x384xf32>, i32 -> vector<8x384xf32>
    %21 = vector.broadcast %18 : vector<1x384xf32> to vector<8x384xf32>
    %22 = arith.mulf %20, %21 : vector<8x384xf32>
    %c383_i32 = arith.constant 383 : i32
    %23 = tpu.dynamic_rotate %17 by %c383_i32 dim 1 : vector<8x384xf32>, i32 -> vector<8x384xf32>
    %24 = vector.broadcast %19 : vector<1x384xf32> to vector<8x384xf32>
    %25 = arith.mulf %23, %24 : vector<8x384xf32>
    %cst_11 = arith.constant 0.000000e+00 : f32
    %26 = vector.broadcast %cst_11 : f32 to vector<16x256xf32>
    %27 = vector.extract_strided_slice %22 {offsets = [0, 0], sizes = [8, 256], strides = [1, 1]} : vector<8x384xf32> to vector<8x256xf32>
    %28 = vector.extract_strided_slice %17 {offsets = [0, 0], sizes = [8, 256], strides = [1, 1]} : vector<8x384xf32> to vector<8x256xf32>
    %29 = vector.extract_strided_slice %25 {offsets = [0, 0], sizes = [8, 256], strides = [1, 1]} : vector<8x384xf32> to vector<8x256xf32>
    %c0_12 = arith.constant 0 : index
    %c0_13 = arith.constant 0 : index
    %c0_14 = arith.constant 0 : index
    %30 = vector.load %arg6[%c0_12, %c0_13, %c0_14] : memref<9x16x8xf32, #tpu.memory_space<vmem>>, vector<1x16x8xf32>
    %31 = vector.shape_cast %30 : vector<1x16x8xf32> to vector<16x8xf32>
    %cst_15 = arith.constant dense<0.000000e+00> : vector<16x256xf32>
    %32 = tpu.matmul %31, %27, %cst_15 {dimension_numbers = #tpu.dot_dimension_numbers<[1], [0], [0], [1], [0, 0, 1, 1], [], []>} : vector<16x8xf32>, vector<8x256xf32>, vector<16x256xf32> -> vector<16x256xf32>
    %33 = arith.addf %26, %32 : vector<16x256xf32>
    %c1_16 = arith.constant 1 : index
    %c0_17 = arith.constant 0 : index
    %c0_18 = arith.constant 0 : index
    %34 = vector.load %arg6[%c1_16, %c0_17, %c0_18] : memref<9x16x8xf32, #tpu.memory_space<vmem>>, vector<1x16x8xf32>
    %35 = vector.shape_cast %34 : vector<1x16x8xf32> to vector<16x8xf32>
    %cst_19 = arith.constant dense<0.000000e+00> : vector<16x256xf32>
    %36 = tpu.matmul %35, %28, %cst_19 {dimension_numbers = #tpu.dot_dimension_numbers<[1], [0], [0], [1], [0, 0, 1, 1], [], []>} : vector<16x8xf32>, vector<8x256xf32>, vector<16x256xf32> -> vector<16x256xf32>
    %37 = arith.addf %33, %36 : vector<16x256xf32>
    %c2 = arith.constant 2 : index
    %c0_20 = arith.constant 0 : index
    %c0_21 = arith.constant 0 : index
    %38 = vector.load %arg6[%c2, %c0_20, %c0_21] : memref<9x16x8xf32, #tpu.memory_space<vmem>>, vector<1x16x8xf32>
    %39 = vector.shape_cast %38 : vector<1x16x8xf32> to vector<16x8xf32>
    %cst_22 = arith.constant dense<0.000000e+00> : vector<16x256xf32>
    %40 = tpu.matmul %39, %29, %cst_22 {dimension_numbers = #tpu.dot_dimension_numbers<[1], [0], [0], [1], [0, 0, 1, 1], [], []>} : vector<16x8xf32>, vector<8x256xf32>, vector<16x256xf32> -> vector<16x256xf32>
    %41 = arith.addf %37, %40 : vector<16x256xf32>
    %c368_i32 = arith.constant 368 : i32
    %42 = tpu.dynamic_rotate %22 by %c368_i32 dim 1 : vector<8x384xf32>, i32 -> vector<8x384xf32>
    %43 = vector.extract_strided_slice %42 {offsets = [0, 0], sizes = [8, 256], strides = [1, 1]} : vector<8x384xf32> to vector<8x256xf32>
    %c368_i32_23 = arith.constant 368 : i32
    %44 = tpu.dynamic_rotate %17 by %c368_i32_23 dim 1 : vector<8x384xf32>, i32 -> vector<8x384xf32>
    %45 = vector.extract_strided_slice %44 {offsets = [0, 0], sizes = [8, 256], strides = [1, 1]} : vector<8x384xf32> to vector<8x256xf32>
    %c368_i32_24 = arith.constant 368 : i32
    %46 = tpu.dynamic_rotate %25 by %c368_i32_24 dim 1 : vector<8x384xf32>, i32 -> vector<8x384xf32>
    %47 = vector.extract_strided_slice %46 {offsets = [0, 0], sizes = [8, 256], strides = [1, 1]} : vector<8x384xf32> to vector<8x256xf32>
    %c3 = arith.constant 3 : index
    %c0_25 = arith.constant 0 : index
    %c0_26 = arith.constant 0 : index
    %48 = vector.load %arg6[%c3, %c0_25, %c0_26] : memref<9x16x8xf32, #tpu.memory_space<vmem>>, vector<1x16x8xf32>
    %49 = vector.shape_cast %48 : vector<1x16x8xf32> to vector<16x8xf32>
    %cst_27 = arith.constant dense<0.000000e+00> : vector<16x256xf32>
    %50 = tpu.matmul %49, %43, %cst_27 {dimension_numbers = #tpu.dot_dimension_numbers<[1], [0], [0], [1], [0, 0, 1, 1], [], []>} : vector<16x8xf32>, vector<8x256xf32>, vector<16x256xf32> -> vector<16x256xf32>
    %51 = arith.addf %41, %50 : vector<16x256xf32>
    %c4 = arith.constant 4 : index
    %c0_28 = arith.constant 0 : index
    %c0_29 = arith.constant 0 : index
    %52 = vector.load %arg6[%c4, %c0_28, %c0_29] : memref<9x16x8xf32, #tpu.memory_space<vmem>>, vector<1x16x8xf32>
    %53 = vector.shape_cast %52 : vector<1x16x8xf32> to vector<16x8xf32>
    %cst_30 = arith.constant dense<0.000000e+00> : vector<16x256xf32>
    %54 = tpu.matmul %53, %45, %cst_30 {dimension_numbers = #tpu.dot_dimension_numbers<[1], [0], [0], [1], [0, 0, 1, 1], [], []>} : vector<16x8xf32>, vector<8x256xf32>, vector<16x256xf32> -> vector<16x256xf32>
    %55 = arith.addf %51, %54 : vector<16x256xf32>
    %c5 = arith.constant 5 : index
    %c0_31 = arith.constant 0 : index
    %c0_32 = arith.constant 0 : index
    %56 = vector.load %arg6[%c5, %c0_31, %c0_32] : memref<9x16x8xf32, #tpu.memory_space<vmem>>, vector<1x16x8xf32>
    %57 = vector.shape_cast %56 : vector<1x16x8xf32> to vector<16x8xf32>
    %cst_33 = arith.constant dense<0.000000e+00> : vector<16x256xf32>
    %58 = tpu.matmul %57, %47, %cst_33 {dimension_numbers = #tpu.dot_dimension_numbers<[1], [0], [0], [1], [0, 0, 1, 1], [], []>} : vector<16x8xf32>, vector<8x256xf32>, vector<16x256xf32> -> vector<16x256xf32>
    %59 = arith.addf %55, %58 : vector<16x256xf32>
    %c352_i32 = arith.constant 352 : i32
    %60 = tpu.dynamic_rotate %22 by %c352_i32 dim 1 : vector<8x384xf32>, i32 -> vector<8x384xf32>
    %61 = vector.extract_strided_slice %60 {offsets = [0, 0], sizes = [8, 256], strides = [1, 1]} : vector<8x384xf32> to vector<8x256xf32>
    %c352_i32_34 = arith.constant 352 : i32
    %62 = tpu.dynamic_rotate %17 by %c352_i32_34 dim 1 : vector<8x384xf32>, i32 -> vector<8x384xf32>
    %63 = vector.extract_strided_slice %62 {offsets = [0, 0], sizes = [8, 256], strides = [1, 1]} : vector<8x384xf32> to vector<8x256xf32>
    %c352_i32_35 = arith.constant 352 : i32
    %64 = tpu.dynamic_rotate %25 by %c352_i32_35 dim 1 : vector<8x384xf32>, i32 -> vector<8x384xf32>
    %65 = vector.extract_strided_slice %64 {offsets = [0, 0], sizes = [8, 256], strides = [1, 1]} : vector<8x384xf32> to vector<8x256xf32>
    %c6 = arith.constant 6 : index
    %c0_36 = arith.constant 0 : index
    %c0_37 = arith.constant 0 : index
    %66 = vector.load %arg6[%c6, %c0_36, %c0_37] : memref<9x16x8xf32, #tpu.memory_space<vmem>>, vector<1x16x8xf32>
    %67 = vector.shape_cast %66 : vector<1x16x8xf32> to vector<16x8xf32>
    %cst_38 = arith.constant dense<0.000000e+00> : vector<16x256xf32>
    %68 = tpu.matmul %67, %61, %cst_38 {dimension_numbers = #tpu.dot_dimension_numbers<[1], [0], [0], [1], [0, 0, 1, 1], [], []>} : vector<16x8xf32>, vector<8x256xf32>, vector<16x256xf32> -> vector<16x256xf32>
    %69 = arith.addf %59, %68 : vector<16x256xf32>
    %c7 = arith.constant 7 : index
    %c0_39 = arith.constant 0 : index
    %c0_40 = arith.constant 0 : index
    %70 = vector.load %arg6[%c7, %c0_39, %c0_40] : memref<9x16x8xf32, #tpu.memory_space<vmem>>, vector<1x16x8xf32>
    %71 = vector.shape_cast %70 : vector<1x16x8xf32> to vector<16x8xf32>
    %cst_41 = arith.constant dense<0.000000e+00> : vector<16x256xf32>
    %72 = tpu.matmul %71, %63, %cst_41 {dimension_numbers = #tpu.dot_dimension_numbers<[1], [0], [0], [1], [0, 0, 1, 1], [], []>} : vector<16x8xf32>, vector<8x256xf32>, vector<16x256xf32> -> vector<16x256xf32>
    %73 = arith.addf %69, %72 : vector<16x256xf32>
    %c8 = arith.constant 8 : index
    %c0_42 = arith.constant 0 : index
    %c0_43 = arith.constant 0 : index
    %74 = vector.load %arg6[%c8, %c0_42, %c0_43] : memref<9x16x8xf32, #tpu.memory_space<vmem>>, vector<1x16x8xf32>
    %75 = vector.shape_cast %74 : vector<1x16x8xf32> to vector<16x8xf32>
    %cst_44 = arith.constant dense<0.000000e+00> : vector<16x256xf32>
    %76 = tpu.matmul %75, %65, %cst_44 {dimension_numbers = #tpu.dot_dimension_numbers<[1], [0], [0], [1], [0, 0, 1, 1], [], []>} : vector<16x8xf32>, vector<8x256xf32>, vector<16x256xf32> -> vector<16x256xf32>
    %77 = arith.addf %73, %76 : vector<16x256xf32>
    %c0_45 = arith.constant 0 : index
    %c0_46 = arith.constant 0 : index
    %c0_47 = arith.constant 0 : index
    %78 = vector.load %arg8[%c0_45, %c0_46, %c0_47] : memref<1x16x256xf32, #tpu.memory_space<vmem>>, vector<1x16x256xf32>
    %79 = vector.shape_cast %78 : vector<1x16x256xf32> to vector<16x256xf32>
    %80 = vector.shape_cast %77 : vector<16x256xf32> to vector<1x16x256xf32>
    tpu.vector_store %arg8[%c0_45, %c0_46, %c0_47], %80 {strides = array<i32>} : memref<1x16x256xf32, #tpu.memory_space<vmem>>, vector<1x16x256xf32>,
    return
  }
  func.func @transform_0(%arg0: i32, %arg1: i32, %arg2: i32) -> (i32, i32, i32) {
    %c0_i32 = arith.constant 0 : i32
    %c0_i32_0 = arith.constant 0 : i32
    return %arg0, %c0_i32, %arg1 : i32, i32, i32
  }
  func.func @transform_1(%arg0: i32, %arg1: i32, %arg2: i32) -> (i32, i32, i32) {
    %c2_i32 = arith.constant 2 : i32
    %0 = arith.muli %arg1, %c2_i32 : i32
    %c1_i32 = arith.constant 1 : i32
    %1 = arith.subi %0, %c1_i32 : i32
    %c0_i32 = arith.constant 0 : i32
    %2 = arith.maxsi %1, %c0_i32 : i32
    %c0_i32_0 = arith.constant 0 : i32
    %c0_i32_1 = arith.constant 0 : i32
    return %arg0, %c0_i32_0, %2 : i32, i32, i32
  }
  func.func @transform_2(%arg0: i32, %arg1: i32, %arg2: i32) -> (i32, i32, i32) {
    %c1_i32 = arith.constant 1 : i32
    %0 = arith.addi %arg1, %c1_i32 : i32
    %c2_i32 = arith.constant 2 : i32
    %1 = arith.muli %0, %c2_i32 : i32
    %c1_i32_0 = arith.constant 1 : i32
    %2 = arith.minsi %1, %c1_i32_0 : i32
    %c0_i32 = arith.constant 0 : i32
    %c0_i32_1 = arith.constant 0 : i32
    return %arg0, %c0_i32, %2 : i32, i32, i32
  }
  func.func @transform_3(%arg0: i32, %arg1: i32, %arg2: i32) -> (i32, i32, i32) {
    %c0_i32 = arith.constant 0 : i32
    %c0_i32_0 = arith.constant 0 : i32
    %c0_i32_1 = arith.constant 0 : i32
    return %c0_i32, %arg2, %c0_i32_0 : i32, i32, i32
  }
  func.func @transform_4(%arg0: i32, %arg1: i32, %arg2: i32) -> (i32, i32) {
    %c0_i32 = arith.constant 0 : i32
    %c0_i32_0 = arith.constant 0 : i32
    %c0_i32_1 = arith.constant 0 : i32
    return %c0_i32, %c0_i32_0 : i32, i32
  }
  func.func @transform_5(%arg0: i32, %arg1: i32, %arg2: i32) -> (i32, i32, i32) {
    %c0_i32 = arith.constant 0 : i32
    return %arg0, %arg2, %arg1 : i32, i32, i32
  }
}

</mosaic_0001>

<llo_original>
// kernel: tpu_custom_call.1
$region0: #{tpu_custom_call.1}
  #allocation0 [shape = 'u32[]', space=smem, size = 0x4, offset = 0x4, fixed_abs, tag = 'smem constant byte address 0x4 - core index']
  #allocation1 [shape = 'u32[144,128]{1,0:T(1,128)}', space=vmem, size = 0x12000, scoped, tag = 'internal scratch']
  %s0 = inlined_call_operand.vmem [shape: f32[2,8,256], index: 0, kind: input, shape index: {}]
  %s1 = inlined_call_operand.vmem [shape: f32[2,8,256], index: 1, kind: input, shape index: {}]
  %s2 = inlined_call_operand.vmem [shape: f32[2,8,256], index: 2, kind: input, shape index: {}]
  %s3 = inlined_call_operand.vmem [shape: f32[9,32,8], index: 3, kind: input, shape index: {}]
  %s4 = inlined_call_operand.vmem [shape: f32[2,384], index: 4, kind: input, shape index: {}]
  %s5 = inlined_call_operand.hbm [shape: f32[2,32,256], index: 5, kind: output, shape index: {}]
  %s6 = sld [smem:[#allocation0]]
  $region91: #{tpu_custom_call.1} parent=0
    _
  %s8 = ssub.s32 1, %s6
  %s9 = scalar_select 0, %s8, %s6
  $region1: #{tpu_custom_call.1} parent=0
    #allocation2 [shape = 'u8[147456]{0}', space=vmem, size = 0x24000, scoped, tag = 'input window, operand 3']
    #allocation3 [shape = 'u8[32768]{0}', space=vmem, size = 0x8000, scoped, tag = 'output window, operand 0']
    #allocation4 [shape = 's32[2]{0}', space=sflag, size = 0x8, scoped, tag = 'scoped memory for tpu_custom_call.1']
    %10 = vsyncpa [#allocation4], 0
    %s11 = scalar_lea.sflag [#allocation4], 1
    %12 = vsyncpa %s11, 0
    loop: start=0, step=1, limit=6
    $region2: #{tpu_custom_call.1} parent=1 // loop_pre_header
      _
    $region3: #{tpu_custom_call.1} parent=1 // loop_header
      %s14 = sphi 0, %s18
      %p15 = scmp.ge.s32.totalorder %s14, 6
      %s21 = sphi 0, %s40
      %s22 = sphi 0, %s36
      %s23 = sphi 0, %s32
      %s24 = sphi 0, %s21
      %s25 = sphi 0, %s22
      %s26 = sphi 0, %s23
      %s27 = sphi 0, %s24
      %s28 = sphi 0, %s25
      %s29 = sphi 0, %s26
      %s45 = sphi 0, %s47
      %s48 = sphi 0, %s45
      %s49 = sphi 0, %s48
      %s65 = sphi 0, %s49
      %s81 = sphi 0, %s83
      %s84 = sphi 0, %s81
      %s85 = sphi 0, %s84
      %s101 = sphi 0, %s85
      %s117 = sphi 0, %s119
      %s120 = sphi 0, %s117
      %s121 = sphi 0, %s120
      %s137 = sphi 0, %s121
      %s143 = sphi 0, %s145
      %s146 = sphi 0, %s143
      %s147 = sphi 0, %s146
      %s163 = sphi 0, %s147
      %s167 = sphi 0, %s167
      %s169 = sphi 0, %s167
      %s170 = sphi 0, %s169
      %s184 = sphi 0, %s170
      %s194 = sphi 0, %s196
      %s197 = sphi 0, %s194
      %s198 = sphi 0, %s197
      %s214 = sphi 0, %s198
    $region4: #{tpu_custom_call.1} parent=1 // loop_header_branch
      %17 = sbr.rel (%p15) target = $region8
    $region5: #{tpu_custom_call.1} parent=1 // loop_body
      %s19 = ssub.s32 %s14, 1
      %s20 = ssub.s32 %s14, 2
      %s30 = sadd.s32 1, %s23
      %p31 = scmp.ge.s32.totalorder %s30, 2
      %s32 = scalar_select %p31, 0, %s30
      %s33 = sadd.s32 1, %s22
      %s34 = scalar_select %p31, %s33, %s22
      %p35 = scmp.ge.s32.totalorder %s34, 1
      %s36 = scalar_select %p35, 0, %s34
      %s37 = sadd.s32 1, %s21
      %s38 = scalar_select %p35, %s37, %s21
      %p39 = scmp.ge.s32.totalorder %s38, 2
      %s40 = scalar_select %p39, 0, %s38
      %s41 = ssub.s32 %s21, %s40
      %s42 = ssub.s32 %s22, %s36
      %s43 = sor.u32 %s41, %s42
      %p44 = scmp.eq.s32.totalorder %s43, 0
      %s46 = sadd.s32 %s45, 1
      %s47 = scalar_select %p44, %s45, %s46
      %p50 = pneg %p44
      %p51 = scmp.eq.s32.totalorder %s14, 3
      %p52 = por %p50, %p51
      %p53 = scmp.ne.s32.totalorder %s45, %s48
      %p54 = scmp.eq.s32.totalorder %s14, 0
      %p55 = por %p53, %p54
      %p56 = scmp.ne.s32.totalorder %s45, %s48
      %p57 = scmp.eq.s32.totalorder %s19, 3
      %p58 = por %p56, %p57
      %p59 = scmp.ne.s32.totalorder %s48, %s49
      %p60 = scmp.eq.s32.totalorder %s19, 0
      %p61 = por %p59, %p60
      %p62 = scmp.ne.s32.totalorder %s48, %s49
      %p63 = scmp.eq.s32.totalorder %s20, 3
      %p64 = por %p62, %p63
      %p66 = scmp.ne.s32.totalorder %s49, %s65
      %p67 = scmp.eq.s32.totalorder %s20, 0
      %p68 = por %p66, %p67
      %s69 = smul.u32 %s22, 2
      %s70 = ssub.s32 %s69, 1
      %p71 = scmp.gt.s32.totalorder %s70, 0
      %s72 = scalar_select %p71, %s70, 0
      %s73 = smul.u32 %s36, 2
      %s74 = ssub.s32 %s73, 1
      %p75 = scmp.gt.s32.totalorder %s74, 0
      %s76 = scalar_select %p75, %s74, 0
      %s77 = ssub.s32 %s21, %s40
      %s78 = ssub.s32 %s72, %s76
      %s79 = sor.u32 %s77, %s78
      %p80 = scmp.eq.s32.totalorder %s79, 0
      %s82 = sadd.s32 %s81, 1
      %s83 = scalar_select %p80, %s81, %s82
      %p86 = pneg %p80
      %p87 = scmp.eq.s32.totalorder %s14, 3
      %p88 = por %p86, %p87
      %p89 = scmp.ne.s32.totalorder %s81, %s84
      %p90 = scmp.eq.s32.totalorder %s14, 0
      %p91 = por %p89, %p90
      %p92 = scmp.ne.s32.totalorder %s81, %s84
      %p93 = scmp.eq.s32.totalorder %s19, 3
      %p94 = por %p92, %p93
      %p95 = scmp.ne.s32.totalorder %s84, %s85
      %p96 = scmp.eq.s32.totalorder %s19, 0
      %p97 = por %p95, %p96
      %p98 = scmp.ne.s32.totalorder %s84, %s85
      %p99 = scmp.eq.s32.totalorder %s20, 3
      %p100 = por %p98, %p99
      %p102 = scmp.ne.s32.totalorder %s85, %s101
      %p103 = scmp.eq.s32.totalorder %s20, 0
      %p104 = por %p102, %p103
      %s105 = sadd.s32 %s22, 1
      %s106 = smul.u32 %s105, 2
      %p107 = scmp.lt.s32.totalorder %s106, 1
      %s108 = scalar_select %p107, %s106, 1
      %s109 = sadd.s32 %s36, 1
      %s110 = smul.u32 %s109, 2
      %p111 = scmp.lt.s32.totalorder %s110, 1
      %s112 = scalar_select %p111, %s110, 1
      %s113 = ssub.s32 %s21, %s40
      %s114 = ssub.s32 %s108, %s112
      %s115 = sor.u32 %s113, %s114
      %p116 = scmp.eq.s32.totalorder %s115, 0
      %s118 = sadd.s32 %s117, 1
      %s119 = scalar_select %p116, %s117, %s118
      %p122 = pneg %p116
      %p123 = scmp.eq.s32.totalorder %s14, 3
      %p124 = por %p122, %p123
      %p125 = scmp.ne.s32.totalorder %s117, %s120
      %p126 = scmp.eq.s32.totalorder %s14, 0
      %p127 = por %p125, %p126
      %p128 = scmp.ne.s32.totalorder %s117, %s120
      %p129 = scmp.eq.s32.totalorder %s19, 3
      %p130 = por %p128, %p129
      %p131 = scmp.ne.s32.totalorder %s120, %s121
      %p132 = scmp.eq.s32.totalorder %s19, 0
      %p133 = por %p131, %p132
      %p134 = scmp.ne.s32.totalorder %s120, %s121
      %p135 = scmp.eq.s32.totalorder %s20, 3
      %p136 = por %p134, %p135
      %p138 = scmp.ne.s32.totalorder %s121, %s137
      %p139 = scmp.eq.s32.totalorder %s20, 0
      %p140 = por %p138, %p139
      %s141 = ssub.s32 %s23, %s32
      %p142 = scmp.eq.s32.totalorder %s141, 0
      %s144 = sadd.s32 %s143, 1
      %s145 = scalar_select %p142, %s143, %s144
      %p148 = pneg %p142
      %p149 = scmp.eq.s32.totalorder %s14, 3
      %p150 = por %p148, %p149
      %p151 = scmp.ne.s32.totalorder %s143, %s146
      %p152 = scmp.eq.s32.totalorder %s14, 0
      %p153 = por %p151, %p152
      %p154 = scmp.ne.s32.totalorder %s143, %s146
      %p155 = scmp.eq.s32.totalorder %s19, 3
      %p156 = por %p154, %p155
      %p157 = scmp.ne.s32.totalorder %s146, %s147
      %p158 = scmp.eq.s32.totalorder %s19, 0
      %p159 = por %p157, %p158
      %p160 = scmp.ne.s32.totalorder %s146, %s147
      %p161 = scmp.eq.s32.totalorder %s20, 3
      %p162 = por %p160, %p161
      %p164 = scmp.ne.s32.totalorder %s147, %s163
      %p165 = scmp.eq.s32.totalorder %s20, 0
      %p166 = por %p164, %p165
      %s168 = sadd.s32 %s167, 1
      %p171 = scmp.eq.s32.totalorder %s14, 3
      %p172 = scmp.ne.s32.totalorder %s167, %s169
      %p173 = scmp.eq.s32.totalorder %s14, 0
      %p174 = por %p172, %p173
      %p175 = scmp.ne.s32.totalorder %s167, %s169
      %p176 = scmp.eq.s32.totalorder %s19, 3
      %p177 = por %p175, %p176
      %p178 = scmp.ne.s32.totalorder %s169, %s170
      %p179 = scmp.eq.s32.totalorder %s19, 0
      %p180 = por %p178, %p179
      %p181 = scmp.ne.s32.totalorder %s169, %s170
      %p182 = scmp.eq.s32.totalorder %s20, 3
      %p183 = por %p181, %p182
      %p185 = scmp.ne.s32.totalorder %s170, %s184
      %p186 = scmp.eq.s32.totalorder %s20, 0
      %p187 = por %p185, %p186
      %s188 = ssub.s32 %s21, %s40
      %s189 = ssub.s32 %s23, %s32
      %s190 = sor.u32 %s188, %s189
      %s191 = ssub.s32 %s22, %s36
      %s192 = sor.u32 %s190, %s191
      %p193 = scmp.eq.s32.totalorder %s192, 0
      %s195 = sadd.s32 %s194, 1
      %s196 = scalar_select %p193, %s194, %s195
      %p199 = pneg %p193
      %p200 = scmp.eq.s32.totalorder %s14, 3
      %p201 = por %p199, %p200
      %p202 = scmp.ne.s32.totalorder %s194, %s197
      %p203 = scmp.eq.s32.totalorder %s14, 0
      %p204 = por %p202, %p203
      %p205 = scmp.ne.s32.totalorder %s194, %s197
      %p206 = scmp.eq.s32.totalorder %s19, 3
      %p207 = por %p205, %p206
      %p208 = scmp.ne.s32.totalorder %s197, %s198
      %p209 = scmp.eq.s32.totalorder %s19, 0
      %p210 = por %p208, %p209
      %p211 = scmp.ne.s32.totalorder %s197, %s198
      %p212 = scmp.eq.s32.totalorder %s20, 3
      %p213 = por %p211, %p212
      %p215 = scmp.ne.s32.totalorder %s198, %s214
      %p216 = scmp.eq.s32.totalorder %s20, 0
      %p217 = por %p215, %p216
      %p218 = scmp.le.s32.totalorder 1, %s14
      %p219 = scmp.lt.s32.totalorder %s14, 5
      %p220 = pnand %p218, %p219
      %p221 = pneg %p220
      // Predicated region
      $region9: #{tpu_custom_call.1} parent=5 // pred_check
        _
      $region10: #{tpu_custom_call.1} parent=5 // pred_check_branch
        %223 = sbr.rel (%p220) target = $region12
      $region11: #{tpu_custom_call.1} parent=5 // pred_region
        %s224 = ssub.s32 %s14, 1
        // Predicated region
        $region13: #{tpu_custom_call.1} parent=11 // pred_check
          %p225 = pneg %p180
        $region14: #{tpu_custom_call.1} parent=11 // pred_check_branch
          %227 = sbr.rel (%p225) target = $region16
        $region15: #{tpu_custom_call.1} parent=11 // pred_region
          _
        $region16: #{tpu_custom_call.1} parent=11 // pred_fallthru
          _
      $region12: #{tpu_custom_call.1} parent=5 // pred_fallthru
        _
      %p228 = scmp.lt.s32.totalorder %s14, 4
      // Predicated region
      $region17: #{tpu_custom_call.1} parent=5 // pred_check
        %p229 = pneg %p228
      $region18: #{tpu_custom_call.1} parent=5 // pred_check_branch
        %231 = sbr.rel (%p229) target = $region20
      $region19: #{tpu_custom_call.1} parent=5 // pred_region
        // Predicated region
        $region21: #{tpu_custom_call.1} parent=19 // pred_check
          %p232 = pneg %p55
        $region22: #{tpu_custom_call.1} parent=19 // pred_check_branch
          %234 = sbr.rel (%p232) target = $region24
        $region23: #{tpu_custom_call.1} parent=19 // pred_region
          %s235 = smul.u32 2, %s22
          %p236 = scmp.lt.s32.totalorder %s21, 1
          %s237 = scalar_select %p236, %s21, 1
          %p238 = scmp.lt.s32.totalorder %s235, 1
          %s239 = scalar_select %p238, %s235, 1
          %s240 = smul.addr %s237, 2
          %s241 = sadd.s32 %s239, %s240
          %s242 = smul.addr %s241, 8
          %s243 = scalar_lea.vmem %s0, %s242
          %s244 = smul.u32 2, %s22
        $region24: #{tpu_custom_call.1} parent=19 // pred_fallthru
          _
        // Predicated region
        $region25: #{tpu_custom_call.1} parent=19 // pred_check
          %p245 = pneg %p91
        $region26: #{tpu_custom_call.1} parent=19 // pred_check_branch
          %247 = sbr.rel (%p245) target = $region28
        $region27: #{tpu_custom_call.1} parent=19 // pred_region
          %s248 = smul.u32 %s22, 2
          %s249 = ssub.s32 %s248, 1
          %p250 = scmp.gt.s32.totalorder %s249, 0
          %s251 = scalar_select %p250, %s249, 0
          %p252 = scmp.lt.s32.totalorder %s21, 1
          %s253 = scalar_select %p252, %s21, 1
          %p254 = scmp.lt.s32.totalorder %s251, 1
          %s255 = scalar_select %p254, %s251, 1
          %s256 = smul.addr %s253, 2
          %s257 = sadd.s32 %s255, %s256
          %s258 = smul.addr %s257, 8
          %s259 = scalar_lea.vmem %s1, %s258
          %s260 = smul.u32 %s22, 2
          %s261 = ssub.s32 %s260, 1
          %p262 = scmp.gt.s32.totalorder %s261, 0
          %s263 = scalar_select %p262, %s261, 0
        $region28: #{tpu_custom_call.1} parent=19 // pred_fallthru
          _
        // Predicated region
        $region29: #{tpu_custom_call.1} parent=19 // pred_check
          %p264 = pneg %p127
        $region30: #{tpu_custom_call.1} parent=19 // pred_check_branch
          %266 = sbr.rel (%p264) target = $region32
        $region31: #{tpu_custom_call.1} parent=19 // pred_region
          %s267 = sadd.s32 %s22, 1
          %s268 = smul.u32 %s267, 2
          %p269 = scmp.lt.s32.totalorder %s268, 1
          %s270 = scalar_select %p269, %s268, 1
          %p271 = scmp.lt.s32.totalorder %s21, 1
          %s272 = scalar_select %p271, %s21, 1
          %p273 = scmp.lt.s32.totalorder %s270, 1
          %s274 = scalar_select %p273, %s270, 1
          %s275 = smul.addr %s272, 2
          %s276 = sadd.s32 %s274, %s275
          %s277 = smul.addr %s276, 8
          %s278 = scalar_lea.vmem %s2, %s277
          %s279 = sadd.s32 %s22, 1
          %s280 = smul.u32 %s279, 2
          %p281 = scmp.lt.s32.totalorder %s280, 1
          %s282 = scalar_select %p281, %s280, 1
        $region32: #{tpu_custom_call.1} parent=19 // pred_fallthru
          _
        // Predicated region
        $region33: #{tpu_custom_call.1} parent=19 // pred_check
          %p283 = pneg %p153
        $region34: #{tpu_custom_call.1} parent=19 // pred_check_branch
          %285 = sbr.rel (%p283) target = $region36
        $region35: #{tpu_custom_call.1} parent=19 // pred_region
          %s286 = sand.u32 %s143, 1
          %s287 = sand.u32 %s143, 1
          %s288 = smul.addr %s287, 144
          %s289 = scalar_lea.vmem [#allocation2], %s288
          %s290 = smul.u32 2, %s23
          %s291 = smul.addr %s290, 8
          %s292 = scalar_lea.vmem %s3, %s291
          // Predicated region
          $region37: #{tpu_custom_call.1} parent=35 // pred_check
            _
          $region38: #{tpu_custom_call.1} parent=35 // pred_check_branch
            %294 = sbr.rel (0) target = $region40
          $region39: #{tpu_custom_call.1} parent=35 // pred_region
            // Predicated region
            $region41: #{tpu_custom_call.1} parent=39 // pred_check
              _
            $region42: #{tpu_custom_call.1} parent=39 // pred_check_branch
              %296 = sbr.rel (0) target = $region44
            $region43: #{tpu_custom_call.1} parent=39 // pred_region
              // Predicated region
              $region56: #{tpu_custom_call.1} parent=43 // pred_check
                _
              $region57: #{tpu_custom_call.1} parent=43 // pred_check_branch
                %345 = sbr.rel (0) target = $region59
              $region58: #{tpu_custom_call.1} parent=43 // pred_region
                loop: start=0, step=1, limit=1
                $region60: #{tpu_custom_call.1} parent=58 // loop_pre_header
                  _
                $region61: #{tpu_custom_call.1} parent=58 // loop_header
                  %s347 = sphi 0, %s351
                  %p348 = scmp.ge.s32.totalorder %s347, 1
                  %s352 = sphi %s292, %s292
                  %s353 = sphi %s289, %s289
                $region62: #{tpu_custom_call.1} parent=58 // loop_header_branch
                  %350 = sbr.rel (%p348) target = $region66
                $region63: #{tpu_custom_call.1} parent=58 // loop_body
                  %v354 = vld [vmem:[%s352] sm:$0xff]
                  %355 = vst [vmem:[%s353] sm:$0xff] %v354
                  %v356 = vld [vmem:[%s352 + $0x8] sm:$0xff]
                  %357 = vst [vmem:[%s353 + $0x8] sm:$0xff] %v356
                  %v358 = vld [vmem:[%s352 + $0x20] sm:$0xff]
                  %359 = vst [vmem:[%s353 + $0x10] sm:$0xff] %v358
                  %v360 = vld [vmem:[%s352 + $0x28] sm:$0xff]
                  %361 = vst [vmem:[%s353 + $0x18] sm:$0xff] %v360
                  %v362 = vld [vmem:[%s352 + $0x40] sm:$0xff]
                  %363 = vst [vmem:[%s353 + $0x20] sm:$0xff] %v362
                  %v364 = vld [vmem:[%s352 + $0x48] sm:$0xff]
                  %365 = vst [vmem:[%s353 + $0x28] sm:$0xff] %v364
                  %v366 = vld [vmem:[%s352 + $0x60] sm:$0xff]
                  %367 = vst [vmem:[%s353 + $0x30] sm:$0xff] %v366
                  %v368 = vld [vmem:[%s352 + $0x68] sm:$0xff]
                  %369 = vst [vmem:[%s353 + $0x38] sm:$0xff] %v368
                  %v370 = vld [vmem:[%s352 + $0x80] sm:$0xff]
                  %371 = vst [vmem:[%s353 + $0x40] sm:$0xff] %v370
                  %v372 = vld [vmem:[%s352 + $0x88] sm:$0xff]
                  %373 = vst [vmem:[%s353 + $0x48] sm:$0xff] %v372
                  %v374 = vld [vmem:[%s352 + $0xa0] sm:$0xff]
                  %375 = vst [vmem:[%s353 + $0x50] sm:$0xff] %v374
                  %v376 = vld [vmem:[%s352 + $0xa8] sm:$0xff]
                  %377 = vst [vmem:[%s353 + $0x58] sm:$0xff] %v376
                  %v378 = vld [vmem:[%s352 + $0xc0] sm:$0xff]
                  %379 = vst [vmem:[%s353 + $0x60] sm:$0xff] %v378
                  %v380 = vld [vmem:[%s352 + $0xc8] sm:$0xff]
                  %381 = vst [vmem:[%s353 + $0x68] sm:$0xff] %v380
                  %v382 = vld [vmem:[%s352 + $0xe0] sm:$0xff]
                  %383 = vst [vmem:[%s353 + $0x70] sm:$0xff] %v382
                  %v384 = vld [vmem:[%s352 + $0xe8] sm:$0xff]
                  %385 = vst [vmem:[%s353 + $0x78] sm:$0xff] %v384
                  %v386 = vld [vmem:[%s352 + $0x100] sm:$0xff]
                  %387 = vst [vmem:[%s353 + $0x80] sm:$0xff] %v386
                  %v388 = vld [vmem:[%s352 + $0x108] sm:$0xff]
                  %389 = vst [vmem:[%s353 + $0x88] sm:$0xff] %v388
                $region64: #{tpu_custom_call.1} parent=58 // loop_footer
                  %s351 = sadd.s32 1, %s347
                $region65: #{tpu_custom_call.1} parent=58 // loop_footer_branch
                  %346 = sbr.rel target = $region61
                $region66: #{tpu_custom_call.1} parent=58 // loop_exit
                  _
              $region59: #{tpu_custom_call.1} parent=43 // pred_fallthru
                _
              // Predicated region
              $region67: #{tpu_custom_call.1} parent=43 // pred_check
                _
              $region68: #{tpu_custom_call.1} parent=43 // pred_check_branch
                %391 = sbr.rel target = $region70
              $region69: #{tpu_custom_call.1} parent=43 // pred_region
                _
              $region70: #{tpu_custom_call.1} parent=43 // pred_fallthru
                _
            $region44: #{tpu_custom_call.1} parent=39 // pred_fallthru
              _
            // Predicated region
            $region45: #{tpu_custom_call.1} parent=39 // pred_check
              _
            $region46: #{tpu_custom_call.1} parent=39 // pred_check_branch
              %298 = sbr.rel target = $region48
            $region47: #{tpu_custom_call.1} parent=39 // pred_region
              loop: start=0, step=1, limit=1
              $region49: #{tpu_custom_call.1} parent=47 // loop_pre_header
                _
              $region50: #{tpu_custom_call.1} parent=47 // loop_header
                %s301 = sphi 0, %s305
                %p302 = scmp.ge.s32.totalorder %s301, 1
                %s306 = sphi %s292, %s292
                %s307 = sphi %s289, %s289
              $region51: #{tpu_custom_call.1} parent=47 // loop_header_branch
                %304 = sbr.rel (%p302) target = $region55
              $region52: #{tpu_custom_call.1} parent=47 // loop_body
                %v308 = vld [vmem:[%s306] sm:$0xff]
                %309 = vst [vmem:[%s307] sm:$0xff] %v308
                %v310 = vld [vmem:[%s306 + $0x8] sm:$0xff]
                %311 = vst [vmem:[%s307 + $0x8] sm:$0xff] %v310
                %v312 = vld [vmem:[%s306 + $0x20] sm:$0xff]
                %313 = vst [vmem:[%s307 + $0x10] sm:$0xff] %v312
                %v314 = vld [vmem:[%s306 + $0x28] sm:$0xff]
                %315 = vst [vmem:[%s307 + $0x18] sm:$0xff] %v314
                %v316 = vld [vmem:[%s306 + $0x40] sm:$0xff]
                %317 = vst [vmem:[%s307 + $0x20] sm:$0xff] %v316
                %v318 = vld [vmem:[%s306 + $0x48] sm:$0xff]
                %319 = vst [vmem:[%s307 + $0x28] sm:$0xff] %v318
                %v320 = vld [vmem:[%s306 + $0x60] sm:$0xff]
                %321 = vst [vmem:[%s307 + $0x30] sm:$0xff] %v320
                %v322 = vld [vmem:[%s306 + $0x68] sm:$0xff]
                %323 = vst [vmem:[%s307 + $0x38] sm:$0xff] %v322
                %v324 = vld [vmem:[%s306 + $0x80] sm:$0xff]
                %325 = vst [vmem:[%s307 + $0x40] sm:$0xff] %v324
                %v326 = vld [vmem:[%s306 + $0x88] sm:$0xff]
                %327 = vst [vmem:[%s307 + $0x48] sm:$0xff] %v326
                %v328 = vld [vmem:[%s306 + $0xa0] sm:$0xff]
                %329 = vst [vmem:[%s307 + $0x50] sm:$0xff] %v328
                %v330 = vld [vmem:[%s306 + $0xa8] sm:$0xff]
                %331 = vst [vmem:[%s307 + $0x58] sm:$0xff] %v330
                %v332 = vld [vmem:[%s306 + $0xc0] sm:$0xff]
                %333 = vst [vmem:[%s307 + $0x60] sm:$0xff] %v332
                %v334 = vld [vmem:[%s306 + $0xc8] sm:$0xff]
                %335 = vst [vmem:[%s307 + $0x68] sm:$0xff] %v334
                %v336 = vld [vmem:[%s306 + $0xe0] sm:$0xff]
                %337 = vst [vmem:[%s307 + $0x70] sm:$0xff] %v336
                %v338 = vld [vmem:[%s306 + $0xe8] sm:$0xff]
                %339 = vst [vmem:[%s307 + $0x78] sm:$0xff] %v338
                %v340 = vld [vmem:[%s306 + $0x100] sm:$0xff]
                %341 = vst [vmem:[%s307 + $0x80] sm:$0xff] %v340
                %v342 = vld [vmem:[%s306 + $0x108] sm:$0xff]
                %343 = vst [vmem:[%s307 + $0x88] sm:$0xff] %v342
              $region53: #{tpu_custom_call.1} parent=47 // loop_footer
                %s305 = sadd.s32 1, %s301
              $region54: #{tpu_custom_call.1} parent=47 // loop_footer_branch
                %300 = sbr.rel target = $region50
              $region55: #{tpu_custom_call.1} parent=47 // loop_exit
                _
            $region48: #{tpu_custom_call.1} parent=39 // pred_fallthru
              _
          $region40: #{tpu_custom_call.1} parent=35 // pred_fallthru
            _
          %392 = vnop
        $region36: #{tpu_custom_call.1} parent=19 // pred_fallthru
          _
      $region20: #{tpu_custom_call.1} parent=5 // pred_fallthru
        _
      %p393 = scmp.le.s32.totalorder 1, %s14
      %p394 = scmp.lt.s32.totalorder %s14, 5
      %p395 = pnand %p393, %p394
      %p396 = pneg %p395
      // Predicated region
      $region71: #{tpu_custom_call.1} parent=5 // pred_check
        _
      $region72: #{tpu_custom_call.1} parent=5 // pred_check_branch
        %398 = sbr.rel (%p395) target = $region74
      $region73: #{tpu_custom_call.1} parent=5 // pred_region
        %s399 = ssub.s32 %s14, 1
        %s400 = sand.u32 %s146, 1
        %s401 = sand.u32 %s146, 1
        %s402 = smul.addr %s401, 144
        %s403 = scalar_lea.vmem [#allocation2], %s402
        // Predicated region
        $region75: #{tpu_custom_call.1} parent=73 // pred_check
          %p404 = pneg %p159
        $region76: #{tpu_custom_call.1} parent=73 // pred_check_branch
          %406 = sbr.rel (%p404) target = $region78
        $region77: #{tpu_custom_call.1} parent=73 // pred_region
          _
        $region78: #{tpu_custom_call.1} parent=73 // pred_fallthru
          _
        %s407 = smul.u32 2, %s25
        %p408 = scmp.lt.s32.totalorder %s24, 1
        %s409 = scalar_select %p408, %s24, 1
        %p410 = scmp.lt.s32.totalorder %s407, 1
        %s411 = scalar_select %p410, %s407, 1
        %s412 = smul.addr %s409, 2
        %s413 = sadd.s32 %s411, %s412
        %s414 = smul.addr %s413, 8
        %s415 = scalar_lea.vmem %s0, %s414
        %p416 = pneg %p61
        %p417 = pneg %p58
        %s418 = smul.u32 %s25, 2
        %s419 = ssub.s32 %s418, 1
        %p420 = scmp.gt.s32.totalorder %s419, 0
        %s421 = scalar_select %p420, %s419, 0
        %p422 = scmp.lt.s32.totalorder %s24, 1
        %s423 = scalar_select %p422, %s24, 1
        %p424 = scmp.lt.s32.totalorder %s421, 1
        %s425 = scalar_select %p424, %s421, 1
        %s426 = smul.addr %s423, 2
        %s427 = sadd.s32 %s425, %s426
        %s428 = smul.addr %s427, 8
        %s429 = scalar_lea.vmem %s1, %s428
        %p430 = pneg %p97
        %p431 = pneg %p94
        %s432 = sadd.s32 %s25, 1
        %s433 = smul.u32 %s432, 2
        %p434 = scmp.lt.s32.totalorder %s433, 1
        %s435 = scalar_select %p434, %s433, 1
        %p436 = scmp.lt.s32.totalorder %s24, 1
        %s437 = scalar_select %p436, %s24, 1
        %p438 = scmp.lt.s32.totalorder %s435, 1
        %s439 = scalar_select %p438, %s435, 1
        %s440 = smul.addr %s437, 2
        %s441 = sadd.s32 %s439, %s440
        %s442 = smul.addr %s441, 8
        %s443 = scalar_lea.vmem %s2, %s442
        %p444 = pneg %p133
        %p445 = pneg %p130
        %s446 = sand.u32 %s146, 1
        %s447 = sand.u32 %s146, 1
        %s448 = smul.addr %s447, 144
        %s449 = scalar_lea.vmem [#allocation2], %s448
        %p450 = pneg %p159
        %p451 = pneg %p156
        %p452 = pneg %p180
        %p453 = pneg %p177
        %p454 = pneg %p210
        %p455 = pneg %p207
        %s456 = sand.u32 %s197, 1
        %s457 = scalar_lea.sflag [#allocation4], %s456
        %s458 = sand.u32 %s197, 1
        %s459 = smul.addr %s458, 32
        %s460 = scalar_lea.vmem [#allocation3], %s459
        %s461 = smul.u32 2, %s25
        %p462 = scmp.lt.s32.totalorder %s24, 1
        %s463 = scalar_select %p462, %s24, 1
        %p464 = scmp.lt.s32.totalorder %s461, 1
        %s465 = scalar_select %p464, %s461, 1
        %s466 = smul.addr %s463, 2
        %s467 = sadd.s32 %s465, %s466
        %s468 = smul.addr %s467, 8
        %s469 = scalar_lea.vmem %s0, %s468
        %s470 = smul.u32 2, %s25
        %s471 = smul.u32 %s25, 2
        %s472 = ssub.s32 %s471, 1
        %p473 = scmp.gt.s32.totalorder %s472, 0
        %s474 = scalar_select %p473, %s472, 0
        %p475 = scmp.lt.s32.totalorder %s24, 1
        %s476 = scalar_select %p475, %s24, 1
        %p477 = scmp.lt.s32.totalorder %s474, 1
        %s478 = scalar_select %p477, %s474, 1
        %s479 = smul.addr %s476, 2
        %s480 = sadd.s32 %s478, %s479
        %s481 = smul.addr %s480, 8
        %s482 = scalar_lea.vmem %s1, %s481
        %s483 = smul.u32 %s25, 2
        %s484 = ssub.s32 %s483, 1
        %p485 = scmp.gt.s32.totalorder %s484, 0
        %s486 = scalar_select %p485, %s484, 0
        %s487 = sadd.s32 %s25, 1
        %s488 = smul.u32 %s487, 2
        %p489 = scmp.lt.s32.totalorder %s488, 1
        %s490 = scalar_select %p489, %s488, 1
        %p491 = scmp.lt.s32.totalorder %s24, 1
        %s492 = scalar_select %p491, %s24, 1
        %p493 = scmp.lt.s32.totalorder %s490, 1
        %s494 = scalar_select %p493, %s490, 1
        %s495 = smul.addr %s492, 2
        %s496 = sadd.s32 %s494, %s495
        %s497 = smul.addr %s496, 8
        %s498 = scalar_lea.vmem %s2, %s497
        %s499 = sadd.s32 %s25, 1
        %s500 = smul.u32 %s499, 2
        %p501 = scmp.lt.s32.totalorder %s500, 1
        %s502 = scalar_select %p501, %s500, 1
        %s503 = smul.u32 2, %s26
        %s504 = smul.u32 2, %s26
        %s505 = smul.u32 2, %s25
        %v506 = vld [vmem:[%s469] sm:$0xff]
        %v507 = vld [vmem:[%s469 + $0x8] sm:$0xff]
        %v508 = vld [vmem:[%s482] sm:$0xff]
        %p509 = scmp.gt.s32.totalorder %s25, 0
        %s510 = scalar_select %p509, 1, 0
        %s511 = scvt.s32.f32 %s510
        %v512 = vstv %s511
        %v513 = vmul.f32 %v508, %v512
        %v514 = vld [vmem:[%s498] sm:$0xff]
        %p515 = scmp.lt.s32.totalorder %s25, 0
        %s516 = scalar_select %p515, 1, 0
        %s517 = scvt.s32.f32 %s516
        %v518 = vstv %s517
        %v519 = vmul.f32 %v514, %v518
        %521 = vrot.lane.b32.xlu0 %v513, 16
        %v522 = vpop.permute.xlu0 %521
        %526 = vrot.lane.b32.xlu0 %v506, 16
        %v527 = vpop.permute.xlu0 %526
        %528 = vrot.lane.b32.xlu0 %v507, 16
        %v529 = vpop.permute.xlu0 %528
        %vm530 = vcmask 130048
        %v531 = vsel %vm530, %v527, %v529
        %536 = vrot.lane.b32.xlu0 %v519, 16
        %v537 = vpop.permute.xlu0 %536
        %v539 = vsel %vm530, %v522, %v527
        %v540 = vsel %vm530, %v529, %v537
        %vm541 = vcmask 261120
        %v542 = vsel %vm541, %v540, 0.0
        %v543 = vld [vmem:[%s4] ss:$2 sm:$0x7]
        %s544 = scalar_lea.vmem %s4, 1
        %v545 = vld [vmem:[%s544] ss:$2 sm:$0x7]
        %546 = vrot.lane.b32.xlu0 %v539, 1
        %v547 = vpop.permute.xlu0 %546
        %548 = vrot.lane.b32.xlu0 %v531, 1
        %v549 = vpop.permute.xlu0 %548
        %550 = vrot.lane.b32.xlu0 %v542, 1
        %v551 = vpop.permute.xlu0 %550
        %v552 = vlaneseq
        %v553 = vand.u32 %v552, 127
        %vm554 = vcmp.lt.s32.totalorder %v553, 1
        %v555 = vsel %vm554, %v549, %v551
        %v556 = vsel %vm554, %v547, %v549
        %v557 = vsel %vm554, %v551, %v547
        %v559 = vlaneseq
        %v560 = vshrl.u32 %v559, 7
        %v561 = vsub.s32 0, %v560
        %v562 = vrot.slane %v543, %v561
        %v563 = vlaneseq
        %v564 = vshrl.u32 %v563, 7
        %v565 = vsub.s32 1, %v564
        %v566 = vrot.slane %v543, %v565
        %v567 = vlaneseq
        %v568 = vshrl.u32 %v567, 7
        %v569 = vsub.s32 2, %v568
        %v570 = vrot.slane %v543, %v569
        %v574 = vmul.f32 %v557, %v562
        %v575 = vmul.f32 %v556, %v566
        %v576 = vmul.f32 %v555, %v570
        %577 = vrot.lane.b32.xlu0 %v539, 127
        %v578 = vpop.permute.xlu0 %577
        %579 = vrot.lane.b32.xlu0 %v531, 127
        %v580 = vpop.permute.xlu0 %579
        %581 = vrot.lane.b32.xlu0 %v542, 127
        %v582 = vpop.permute.xlu0 %581
        %vm583 = vcmp.lt.s32.totalorder %v553, 127
        %v584 = vsel %vm583, %v580, %v582
        %v585 = vsel %vm583, %v578, %v580
        %v586 = vsel %vm583, %v582, %v578
        %v588 = vlaneseq
        %v589 = vshrl.u32 %v588, 7
        %v590 = vsub.s32 0, %v589
        %v591 = vrot.slane %v545, %v590
        %v592 = vlaneseq
        %v593 = vshrl.u32 %v592, 7
        %v594 = vsub.s32 1, %v593
        %v595 = vrot.slane %v545, %v594
        %v596 = vlaneseq
        %v597 = vshrl.u32 %v596, 7
        %v598 = vsub.s32 2, %v597
        %v599 = vrot.slane %v545, %v598
        %v603 = vmul.f32 %v585, %v591
        %v604 = vmul.f32 %v584, %v595
        %v605 = vmul.f32 %v586, %v599
        %v606 = vld [vmem:[%s403] sm:$0xff]
        %v607 = vld [vmem:[%s403 + $0x8] sm:$0xff]
        %s608 = scalar_lea.vmem %s403, 16 [#allocation2]
        %v609 = vld [vmem:[%s608] sm:$0xff]
        %v610 = vld [vmem:[%s608 + $0x8] sm:$0xff]
        %vm611 = vcmask 64512
        %v613 = vsel %vm611, %v609, 0
        %v616 = vsel %vm611, %v610, 0
        %618 = vmatprep.subr.mxu0 %v531
        %619 = vmatpush1.msra.mxu0 %v539
        %620 = vmatprep.subr.mxu0 0.0
        %621 = vmatpush1.msra.mxu0 0.0
        %622 = vmatprep.subr.mxu0 0.0
        %623 = vmatpush1.msra.mxu0 0.0
        %624 = vmatprep.subr.mxu0 0.0
        %625 = vmatpush1.msra.mxu0 0.0
        %626 = vmatprep.subr.mxu0 0.0
        %627 = vmatpush1.msra.mxu0 0.0
        %628 = vmatprep.subr.mxu0 0.0
        %629 = vmatpush1.msra.mxu0 0.0
        %630 = vmatprep.subr.mxu0 0.0
        %631 = vmatpush1.msra.mxu0 0.0
        %632 = vmatprep.subr.mxu0 0.0
        %633 = vmatpush1.msra.mxu0 0.0
        %634 = vmatprep.subr.mxu0 0.0
        %635 = vmatpush1.msra.mxu0 0.0
        %636 = vmatprep.subr.mxu0 0.0
        %637 = vmatpush1.msra.mxu0 0.0
        %638 = vmatprep.subr.mxu0 0.0
        %639 = vmatpush1.msra.mxu0 0.0
        %640 = vmatprep.subr.mxu0 0.0
        %641 = vmatpush1.msra.mxu0 0.0
        %642 = vmatprep.subr.mxu0 0.0
        %643 = vmatpush1.msra.mxu0 0.0
        %644 = vmatprep.subr.mxu0 0.0
        %645 = vmatpush1.msra.mxu0 0.0
        %646 = vmatprep.subr.mxu0 0.0
        %647 = vmatpush1.msra.mxu0 0.0
        %648 = vmatprep.subr.mxu0 0.0
        %649 = vmatpush1.msra.mxu0 0.0
        %650 = vmatprep.subr.mxu0 0.0
        %651 = vmatpush1.msra.mxu0 0.0
        %652 = vmatprep.subr.mxu0 0.0
        %653 = vmatpush1.msra.mxu0 0.0
        %654 = vmatprep.subr.mxu0 0.0
        %655 = vmatpush1.msra.mxu0 0.0
        %656 = vmatprep.subr.mxu0 0.0
        %657 = vmatpush1.msra.mxu0 0.0
        %658 = vmatprep.subr.mxu0 0.0
        %659 = vmatpush1.msra.mxu0 0.0
        %660 = vmatprep.subr.mxu0 0.0
        %661 = vmatpush1.msra.mxu0 0.0
        %662 = vmatprep.subr.mxu0 0.0
        %663 = vmatpush1.msra.mxu0 0.0
        %664 = vmatprep.subr.mxu0 0.0
        %665 = vmatpush1.msra.mxu0 0.0
        %666 = vmatprep.subr.mxu0 0.0
        %667 = vmatpush1.msra.mxu0 0.0
        %668 = vmatprep.subr.mxu0 0.0
        %669 = vmatpush1.msra.mxu0 0.0
        %670 = vmatprep.subr.mxu0 0.0
        %671 = vmatpush1.msra.mxu0 0.0
        %672 = vmatprep.subr.mxu0 0.0
        %673 = vmatpush1.msra.mxu0 0.0
        %674 = vmatprep.subr.mxu0 0.0
        %675 = vmatpush1.msra.mxu0 0.0
        %676 = vmatprep.subr.mxu0 0.0
        %677 = vmatpush1.msra.mxu0 0.0
        %678 = vmatprep.subr.mxu0 0.0
        %679 = vmatpush1.msra.mxu0 0.0
        %680 = vmatprep.subr.mxu0 0.0
        %681 = vmatpush1.msra.mxu0 0.0
        %682 = vmatprep.mubr.f32.mxu0 0.0
        %683 = vmatmul.mubr.f32.gmra.mrb[0].mxu0 %v613
        %v684 = vpop.f32.mrb[0].mxu0
        %v685 = vadd.f32 0.0, %v684
        %v686 = vpop.f32.mrb[0].mxu0
        %v687 = vadd.f32 0.0, %v686
        %688 = vmatprep.mubr.f32.mxu0 0.0
        %689 = vmatmul.mubr.f32.gmra.mrb[0].mxu0 %v616
        %v690 = vpop.f32.mrb[0].mxu0
        %v691 = vadd.f32 0.0, %v690
        %v692 = vpop.f32.mrb[0].mxu0
        %v693 = vadd.f32 0.0, %v692
        %694 = vdwg.mxu0
        %v696 = vsel %vm611, %v606, 0
        %v699 = vsel %vm611, %v607, 0
        %701 = vmatprep.subr.mxu0 %v575
        %702 = vmatpush1.msra.mxu0 %v574
        %703 = vmatprep.subr.mxu0 0.0
        %704 = vmatpush1.msra.mxu0 0.0
        %705 = vmatprep.subr.mxu0 0.0
        %706 = vmatpush1.msra.mxu0 0.0
        %707 = vmatprep.subr.mxu0 0.0
        %708 = vmatpush1.msra.mxu0 0.0
        %709 = vmatprep.subr.mxu0 0.0
        %710 = vmatpush1.msra.mxu0 0.0
        %711 = vmatprep.subr.mxu0 0.0
        %712 = vmatpush1.msra.mxu0 0.0
        %713 = vmatprep.subr.mxu0 0.0
        %714 = vmatpush1.msra.mxu0 0.0
        %715 = vmatprep.subr.mxu0 0.0
        %716 = vmatpush1.msra.mxu0 0.0
        %717 = vmatprep.subr.mxu0 0.0
        %718 = vmatpush1.msra.mxu0 0.0
        %719 = vmatprep.subr.mxu0 0.0
        %720 = vmatpush1.msra.mxu0 0.0
        %721 = vmatprep.subr.mxu0 0.0
        %722 = vmatpush1.msra.mxu0 0.0
        %723 = vmatprep.subr.mxu0 0.0
        %724 = vmatpush1.msra.mxu0 0.0
        %725 = vmatprep.subr.mxu0 0.0
        %726 = vmatpush1.msra.mxu0 0.0
        %727 = vmatprep.subr.mxu0 0.0
        %728 = vmatpush1.msra.mxu0 0.0
        %729 = vmatprep.subr.mxu0 0.0
        %730 = vmatpush1.msra.mxu0 0.0
        %731 = vmatprep.subr.mxu0 0.0
        %732 = vmatpush1.msra.mxu0 0.0
        %733 = vmatprep.subr.mxu0 0.0
        %734 = vmatpush1.msra.mxu0 0.0
        %735 = vmatprep.subr.mxu0 0.0
        %736 = vmatpush1.msra.mxu0 0.0
        %737 = vmatprep.subr.mxu0 0.0
        %738 = vmatpush1.msra.mxu0 0.0
        %739 = vmatprep.subr.mxu0 0.0
        %740 = vmatpush1.msra.mxu0 0.0
        %741 = vmatprep.subr.mxu0 0.0
        %742 = vmatpush1.msra.mxu0 0.0
        %743 = vmatprep.subr.mxu0 0.0
        %744 = vmatpush1.msra.mxu0 0.0
        %745 = vmatprep.subr.mxu0 0.0
        %746 = vmatpush1.msra.mxu0 0.0
        %747 = vmatprep.subr.mxu0 0.0
        %748 = vmatpush1.msra.mxu0 0.0
        %749 = vmatprep.subr.mxu0 0.0
        %750 = vmatpush1.msra.mxu0 0.0
        %751 = vmatprep.subr.mxu0 0.0
        %752 = vmatpush1.msra.mxu0 0.0
        %753 = vmatprep.subr.mxu0 0.0
        %754 = vmatpush1.msra.mxu0 0.0
        %755 = vmatprep.subr.mxu0 0.0
        %756 = vmatpush1.msra.mxu0 0.0
        %757 = vmatprep.subr.mxu0 0.0
        %758 = vmatpush1.msra.mxu0 0.0
        %759 = vmatprep.subr.mxu0 0.0
        %760 = vmatpush1.msra.mxu0 0.0
        %761 = vmatprep.subr.mxu0 0.0
        %762 = vmatpush1.msra.mxu0 0.0
        %763 = vmatprep.subr.mxu0 0.0
        %764 = vmatpush1.msra.mxu0 0.0
        %765 = vmatprep.mubr.f32.mxu0 0.0
        %766 = vmatmul.mubr.f32.gmra.mrb[0].mxu0 %v696
        %v767 = vpop.f32.mrb[0].mxu0
        %v768 = vadd.f32 %v685, %v767
        %v769 = vpop.f32.mrb[0].mxu0
        %v770 = vadd.f32 %v687, %v769
        %771 = vmatprep.mubr.f32.mxu0 0.0
        %772 = vmatmul.mubr.f32.gmra.mrb[0].mxu0 %v699
        %v773 = vpop.f32.mrb[0].mxu0
        %v774 = vadd.f32 %v691, %v773
        %v775 = vpop.f32.mrb[0].mxu0
        %v776 = vadd.f32 %v693, %v775
        %777 = vdwg.mxu0
        %s778 = scalar_lea.vmem %s403, 32 [#allocation2]
        %v779 = vld [vmem:[%s778] sm:$0xff]
        %v780 = vld [vmem:[%s778 + $0x8] sm:$0xff]
        %v782 = vsel %vm611, %v779, 0
        %v785 = vsel %vm611, %v780, 0
        %787 = vmatprep.subr.mxu0 %v604
        %788 = vmatpush1.msra.mxu0 %v603
        %789 = vmatprep.subr.mxu0 0.0
        %790 = vmatpush1.msra.mxu0 0.0
        %791 = vmatprep.subr.mxu0 0.0
        %792 = vmatpush1.msra.mxu0 0.0
        %793 = vmatprep.subr.mxu0 0.0
        %794 = vmatpush1.msra.mxu0 0.0
        %795 = vmatprep.subr.mxu0 0.0
        %796 = vmatpush1.msra.mxu0 0.0
        %797 = vmatprep.subr.mxu0 0.0
        %798 = vmatpush1.msra.mxu0 0.0
        %799 = vmatprep.subr.mxu0 0.0
        %800 = vmatpush1.msra.mxu0 0.0
        %801 = vmatprep.subr.mxu0 0.0
        %802 = vmatpush1.msra.mxu0 0.0
        %803 = vmatprep.subr.mxu0 0.0
        %804 = vmatpush1.msra.mxu0 0.0
        %805 = vmatprep.subr.mxu0 0.0
        %806 = vmatpush1.msra.mxu0 0.0
        %807 = vmatprep.subr.mxu0 0.0
        %808 = vmatpush1.msra.mxu0 0.0
        %809 = vmatprep.subr.mxu0 0.0
        %810 = vmatpush1.msra.mxu0 0.0
        %811 = vmatprep.subr.mxu0 0.0
        %812 = vmatpush1.msra.mxu0 0.0
        %813 = vmatprep.subr.mxu0 0.0
        %814 = vmatpush1.msra.mxu0 0.0
        %815 = vmatprep.subr.mxu0 0.0
        %816 = vmatpush1.msra.mxu0 0.0
        %817 = vmatprep.subr.mxu0 0.0
        %818 = vmatpush1.msra.mxu0 0.0
        %819 = vmatprep.subr.mxu0 0.0
        %820 = vmatpush1.msra.mxu0 0.0
        %821 = vmatprep.subr.mxu0 0.0
        %822 = vmatpush1.msra.mxu0 0.0
        %823 = vmatprep.subr.mxu0 0.0
        %824 = vmatpush1.msra.mxu0 0.0
        %825 = vmatprep.subr.mxu0 0.0
        %826 = vmatpush1.msra.mxu0 0.0
        %827 = vmatprep.subr.mxu0 0.0
        %828 = vmatpush1.msra.mxu0 0.0
        %829 = vmatprep.subr.mxu0 0.0
        %830 = vmatpush1.msra.mxu0 0.0
        %831 = vmatprep.subr.mxu0 0.0
        %832 = vmatpush1.msra.mxu0 0.0
        %833 = vmatprep.subr.mxu0 0.0
        %834 = vmatpush1.msra.mxu0 0.0
        %835 = vmatprep.subr.mxu0 0.0
        %836 = vmatpush1.msra.mxu0 0.0
        %837 = vmatprep.subr.mxu0 0.0
        %838 = vmatpush1.msra.mxu0 0.0
        %839 = vmatprep.subr.mxu0 0.0
        %840 = vmatpush1.msra.mxu0 0.0
        %841 = vmatprep.subr.mxu0 0.0
        %842 = vmatpush1.msra.mxu0 0.0
        %843 = vmatprep.subr.mxu0 0.0
        %844 = vmatpush1.msra.mxu0 0.0
        %845 = vmatprep.subr.mxu0 0.0
        %846 = vmatpush1.msra.mxu0 0.0
        %847 = vmatprep.subr.mxu0 0.0
        %848 = vmatpush1.msra.mxu0 0.0
        %849 = vmatprep.subr.mxu0 0.0
        %850 = vmatpush1.msra.mxu0 0.0
        %851 = vmatprep.mubr.f32.mxu0 0.0
        %852 = vmatmul.mubr.f32.gmra.mrb[0].mxu0 %v782
        %v853 = vpop.f32.mrb[0].mxu0
        %v854 = vadd.f32 0.0, %v853
        %v855 = vpop.f32.mrb[0].mxu0
        %v856 = vadd.f32 0.0, %v855
        %857 = vmatprep.mubr.f32.mxu0 0.0
        %858 = vmatmul.mubr.f32.gmra.mrb[0].mxu0 %v785
        %v859 = vpop.f32.mrb[0].mxu0
        %v860 = vadd.f32 0.0, %v859
        %v861 = vpop.f32.mrb[0].mxu0
        %v862 = vadd.f32 0.0, %v861
        %863 = vdwg.mxu0
        %v864 = vadd.f32 %v768, %v854
        %v865 = vadd.f32 %v770, %v856
        %v866 = vadd.f32 %v774, %v860
        %v867 = vadd.f32 %v776, %v862
        %868 = vrot.lane.b32.xlu0 %v574, 112
        %v869 = vpop.permute.xlu0 %868
        %870 = vrot.lane.b32.xlu0 %v575, 112
        %v871 = vpop.permute.xlu0 %870
        %872 = vrot.lane.b32.xlu0 %v576, 112
        %v873 = vpop.permute.xlu0 %872
        %vm874 = vcmp.lt.s32.totalorder %v553, 112
        %v875 = vsel %vm874, %v871, %v873
        %v876 = vsel %vm874, %v869, %v871
        %877 = vrot.lane.b32.xlu0 %v539, 112
        %v878 = vpop.permute.xlu0 %877
        %879 = vrot.lane.b32.xlu0 %v531, 112
        %v880 = vpop.permute.xlu0 %879
        %881 = vrot.lane.b32.xlu0 %v542, 112
        %v882 = vpop.permute.xlu0 %881
        %v883 = vsel %vm874, %v880, %v882
        %v884 = vsel %vm874, %v878, %v880
        %885 = vrot.lane.b32.xlu0 %v603, 112
        %v886 = vpop.permute.xlu0 %885
        %887 = vrot.lane.b32.xlu0 %v604, 112
        %v888 = vpop.permute.xlu0 %887
        %889 = vrot.lane.b32.xlu0 %v605, 112
        %v890 = vpop.permute.xlu0 %889
        %v891 = vsel %vm874, %v888, %v890
        %v892 = vsel %vm874, %v886, %v888
        %s893 = scalar_lea.vmem %s403, 48 [#allocation2]
        %v894 = vld [vmem:[%s893] sm:$0xff]
        %v895 = vld [vmem:[%s893 + $0x8] sm:$0xff]
        %v897 = vsel %vm611, %v894, 0
        %v900 = vsel %vm611, %v895, 0
        %902 = vmatprep.subr.mxu0 %v875
        %903 = vmatpush1.msra.mxu0 %v876
        %904 = vmatprep.subr.mxu0 0.0
        %905 = vmatpush1.msra.mxu0 0.0
        %906 = vmatprep.subr.mxu0 0.0
        %907 = vmatpush1.msra.mxu0 0.0
        %908 = vmatprep.subr.mxu0 0.0
        %909 = vmatpush1.msra.mxu0 0.0
        %910 = vmatprep.subr.mxu0 0.0
        %911 = vmatpush1.msra.mxu0 0.0
        %912 = vmatprep.subr.mxu0 0.0
        %913 = vmatpush1.msra.mxu0 0.0
        %914 = vmatprep.subr.mxu0 0.0
        %915 = vmatpush1.msra.mxu0 0.0
        %916 = vmatprep.subr.mxu0 0.0
        %917 = vmatpush1.msra.mxu0 0.0
        %918 = vmatprep.subr.mxu0 0.0
        %919 = vmatpush1.msra.mxu0 0.0
        %920 = vmatprep.subr.mxu0 0.0
        %921 = vmatpush1.msra.mxu0 0.0
        %922 = vmatprep.subr.mxu0 0.0
        %923 = vmatpush1.msra.mxu0 0.0
        %924 = vmatprep.subr.mxu0 0.0
        %925 = vmatpush1.msra.mxu0 0.0
        %926 = vmatprep.subr.mxu0 0.0
        %927 = vmatpush1.msra.mxu0 0.0
        %928 = vmatprep.subr.mxu0 0.0
        %929 = vmatpush1.msra.mxu0 0.0
        %930 = vmatprep.subr.mxu0 0.0
        %931 = vmatpush1.msra.mxu0 0.0
        %932 = vmatprep.subr.mxu0 0.0
        %933 = vmatpush1.msra.mxu0 0.0
        %934 = vmatprep.subr.mxu0 0.0
        %935 = vmatpush1.msra.mxu0 0.0
        %936 = vmatprep.subr.mxu0 0.0
        %937 = vmatpush1.msra.mxu0 0.0
        %938 = vmatprep.subr.mxu0 0.0
        %939 = vmatpush1.msra.mxu0 0.0
        %940 = vmatprep.subr.mxu0 0.0
        %941 = vmatpush1.msra.mxu0 0.0
        %942 = vmatprep.subr.mxu0 0.0
        %943 = vmatpush1.msra.mxu0 0.0
        %944 = vmatprep.subr.mxu0 0.0
        %945 = vmatpush1.msra.mxu0 0.0
        %946 = vmatprep.subr.mxu0 0.0
        %947 = vmatpush1.msra.mxu0 0.0
        %948 = vmatprep.subr.mxu0 0.0
        %949 = vmatpush1.msra.mxu0 0.0
        %950 = vmatprep.subr.mxu0 0.0
        %951 = vmatpush1.msra.mxu0 0.0
        %952 = vmatprep.subr.mxu0 0.0
        %953 = vmatpush1.msra.mxu0 0.0
        %954 = vmatprep.subr.mxu0 0.0
        %955 = vmatpush1.msra.mxu0 0.0
        %956 = vmatprep.subr.mxu0 0.0
        %957 = vmatpush1.msra.mxu0 0.0
        %958 = vmatprep.subr.mxu0 0.0
        %959 = vmatpush1.msra.mxu0 0.0
        %960 = vmatprep.subr.mxu0 0.0
        %961 = vmatpush1.msra.mxu0 0.0
        %962 = vmatprep.subr.mxu0 0.0
        %963 = vmatpush1.msra.mxu0 0.0
        %964 = vmatprep.subr.mxu0 0.0
        %965 = vmatpush1.msra.mxu0 0.0
        %966 = vmatprep.mubr.f32.mxu0 0.0
        %967 = vmatmul.mubr.f32.gmra.mrb[0].mxu0 %v897
        %v968 = vpop.f32.mrb[0].mxu0
        %v969 = vadd.f32 0.0, %v968
        %v970 = vpop.f32.mrb[0].mxu0
        %v971 = vadd.f32 0.0, %v970
        %972 = vmatprep.mubr.f32.mxu0 0.0
        %973 = vmatmul.mubr.f32.gmra.mrb[0].mxu0 %v900
        %v974 = vpop.f32.mrb[0].mxu0
        %v975 = vadd.f32 0.0, %v974
        %v976 = vpop.f32.mrb[0].mxu0
        %v977 = vadd.f32 0.0, %v976
        %978 = vdwg.mxu0
        %v979 = vadd.f32 %v864, %v969
        %v980 = vadd.f32 %v865, %v971
        %v981 = vadd.f32 %v866, %v975
        %v982 = vadd.f32 %v867, %v977
        %s983 = scalar_lea.vmem %s403, 64 [#allocation2]
        %v984 = vld [vmem:[%s983] sm:$0xff]
        %v985 = vld [vmem:[%s983 + $0x8] sm:$0xff]
        %v987 = vsel %vm611, %v984, 0
        %v990 = vsel %vm611, %v985, 0
        %992 = vmatprep.subr.mxu0 %v883
        %993 = vmatpush1.msra.mxu0 %v884
        %994 = vmatprep.subr.mxu0 0.0
        %995 = vmatpush1.msra.mxu0 0.0
        %996 = vmatprep.subr.mxu0 0.0
        %997 = vmatpush1.msra.mxu0 0.0
        %998 = vmatprep.subr.mxu0 0.0
        %999 = vmatpush1.msra.mxu0 0.0
        %1000 = vmatprep.subr.mxu0 0.0
        %1001 = vmatpush1.msra.mxu0 0.0
        %1002 = vmatprep.subr.mxu0 0.0
        %1003 = vmatpush1.msra.mxu0 0.0
        %1004 = vmatprep.subr.mxu0 0.0
        %1005 = vmatpush1.msra.mxu0 0.0
        %1006 = vmatprep.subr.mxu0 0.0
        %1007 = vmatpush1.msra.mxu0 0.0
        %1008 = vmatprep.subr.mxu0 0.0
        %1009 = vmatpush1.msra.mxu0 0.0
        %1010 = vmatprep.subr.mxu0 0.0
        %1011 = vmatpush1.msra.mxu0 0.0
        %1012 = vmatprep.subr.mxu0 0.0
        %1013 = vmatpush1.msra.mxu0 0.0
        %1014 = vmatprep.subr.mxu0 0.0
        %1015 = vmatpush1.msra.mxu0 0.0
        %1016 = vmatprep.subr.mxu0 0.0
        %1017 = vmatpush1.msra.mxu0 0.0
        %1018 = vmatprep.subr.mxu0 0.0
        %1019 = vmatpush1.msra.mxu0 0.0
        %1020 = vmatprep.subr.mxu0 0.0
        %1021 = vmatpush1.msra.mxu0 0.0
        %1022 = vmatprep.subr.mxu0 0.0
        %1023 = vmatpush1.msra.mxu0 0.0
        %1024 = vmatprep.subr.mxu0 0.0
        %1025 = vmatpush1.msra.mxu0 0.0
        %1026 = vmatprep.subr.mxu0 0.0
        %1027 = vmatpush1.msra.mxu0 0.0
        %1028 = vmatprep.subr.mxu0 0.0
        %1029 = vmatpush1.msra.mxu0 0.0
        %1030 = vmatprep.subr.mxu0 0.0
        %1031 = vmatpush1.msra.mxu0 0.0
        %1032 = vmatprep.subr.mxu0 0.0
        %1033 = vmatpush1.msra.mxu0 0.0
        %1034 = vmatprep.subr.mxu0 0.0
        %1035 = vmatpush1.msra.mxu0 0.0
        %1036 = vmatprep.subr.mxu0 0.0
        %1037 = vmatpush1.msra.mxu0 0.0
        %1038 = vmatprep.subr.mxu0 0.0
        %1039 = vmatpush1.msra.mxu0 0.0
        %1040 = vmatprep.subr.mxu0 0.0
        %1041 = vmatpush1.msra.mxu0 0.0
        %1042 = vmatprep.subr.mxu0 0.0
        %1043 = vmatpush1.msra.mxu0 0.0
        %1044 = vmatprep.subr.mxu0 0.0
        %1045 = vmatpush1.msra.mxu0 0.0
        %1046 = vmatprep.subr.mxu0 0.0
        %1047 = vmatpush1.msra.mxu0 0.0
        %1048 = vmatprep.subr.mxu0 0.0
        %1049 = vmatpush1.msra.mxu0 0.0
        %1050 = vmatprep.subr.mxu0 0.0
        %1051 = vmatpush1.msra.mxu0 0.0
        %1052 = vmatprep.subr.mxu0 0.0
        %1053 = vmatpush1.msra.mxu0 0.0
        %1054 = vmatprep.subr.mxu0 0.0
        %1055 = vmatpush1.msra.mxu0 0.0
        %1056 = vmatprep.mubr.f32.mxu0 0.0
        %1057 = vmatmul.mubr.f32.gmra.mrb[0].mxu0 %v987
        %v1058 = vpop.f32.mrb[0].mxu0
        %v1059 = vadd.f32 0.0, %v1058
        %v1060 = vpop.f32.mrb[0].mxu0
        %v1061 = vadd.f32 0.0, %v1060
        %1062 = vmatprep.mubr.f32.mxu0 0.0
        %1063 = vmatmul.mubr.f32.gmra.mrb[0].mxu0 %v990
        %v1064 = vpop.f32.mrb[0].mxu0
        %v1065 = vadd.f32 0.0, %v1064
        %v1066 = vpop.f32.mrb[0].mxu0
        %v1067 = vadd.f32 0.0, %v1066
        %1068 = vdwg.mxu0
        %v1069 = vadd.f32 %v979, %v1059
        %v1070 = vadd.f32 %v980, %v1061
        %v1071 = vadd.f32 %v981, %v1065
        %v1072 = vadd.f32 %v982, %v1067
        %s1073 = scalar_lea.vmem %s403, 80 [#allocation2]
        %v1074 = vld [vmem:[%s1073] sm:$0xff]
        %v1075 = vld [vmem:[%s1073 + $0x8] sm:$0xff]
        %v1077 = vsel %vm611, %v1074, 0
        %v1080 = vsel %vm611, %v1075, 0
        %1082 = vmatprep.subr.mxu0 %v891
        %1083 = vmatpush1.msra.mxu0 %v892
        %1084 = vmatprep.subr.mxu0 0.0
        %1085 = vmatpush1.msra.mxu0 0.0
        %1086 = vmatprep.subr.mxu0 0.0
        %1087 = vmatpush1.msra.mxu0 0.0
        %1088 = vmatprep.subr.mxu0 0.0
        %1089 = vmatpush1.msra.mxu0 0.0
        %1090 = vmatprep.subr.mxu0 0.0
        %1091 = vmatpush1.msra.mxu0 0.0
        %1092 = vmatprep.subr.mxu0 0.0
        %1093 = vmatpush1.msra.mxu0 0.0
        %1094 = vmatprep.subr.mxu0 0.0
        %1095 = vmatpush1.msra.mxu0 0.0
        %1096 = vmatprep.subr.mxu0 0.0
        %1097 = vmatpush1.msra.mxu0 0.0
        %1098 = vmatprep.subr.mxu0 0.0
        %1099 = vmatpush1.msra.mxu0 0.0
        %1100 = vmatprep.subr.mxu0 0.0
        %1101 = vmatpush1.msra.mxu0 0.0
        %1102 = vmatprep.subr.mxu0 0.0
        %1103 = vmatpush1.msra.mxu0 0.0
        %1104 = vmatprep.subr.mxu0 0.0
        %1105 = vmatpush1.msra.mxu0 0.0
        %1106 = vmatprep.subr.mxu0 0.0
        %1107 = vmatpush1.msra.mxu0 0.0
        %1108 = vmatprep.subr.mxu0 0.0
        %1109 = vmatpush1.msra.mxu0 0.0
        %1110 = vmatprep.subr.mxu0 0.0
        %1111 = vmatpush1.msra.mxu0 0.0
        %1112 = vmatprep.subr.mxu0 0.0
        %1113 = vmatpush1.msra.mxu0 0.0
        %1114 = vmatprep.subr.mxu0 0.0
        %1115 = vmatpush1.msra.mxu0 0.0
        %1116 = vmatprep.subr.mxu0 0.0
        %1117 = vmatpush1.msra.mxu0 0.0
        %1118 = vmatprep.subr.mxu0 0.0
        %1119 = vmatpush1.msra.mxu0 0.0
        %1120 = vmatprep.subr.mxu0 0.0
        %1121 = vmatpush1.msra.mxu0 0.0
        %1122 = vmatprep.subr.mxu0 0.0
        %1123 = vmatpush1.msra.mxu0 0.0
        %1124 = vmatprep.subr.mxu0 0.0
        %1125 = vmatpush1.msra.mxu0 0.0
        %1126 = vmatprep.subr.mxu0 0.0
        %1127 = vmatpush1.msra.mxu0 0.0
        %1128 = vmatprep.subr.mxu0 0.0
        %1129 = vmatpush1.msra.mxu0 0.0
        %1130 = vmatprep.subr.mxu0 0.0
        %1131 = vmatpush1.msra.mxu0 0.0
        %1132 = vmatprep.subr.mxu0 0.0
        %1133 = vmatpush1.msra.mxu0 0.0
        %1134 = vmatprep.subr.mxu0 0.0
        %1135 = vmatpush1.msra.mxu0 0.0
        %1136 = vmatprep.subr.mxu0 0.0
        %1137 = vmatpush1.msra.mxu0 0.0
        %1138 = vmatprep.subr.mxu0 0.0
        %1139 = vmatpush1.msra.mxu0 0.0
        %1140 = vmatprep.subr.mxu0 0.0
        %1141 = vmatpush1.msra.mxu0 0.0
        %1142 = vmatprep.subr.mxu0 0.0
        %1143 = vmatpush1.msra.mxu0 0.0
        %1144 = vmatprep.subr.mxu0 0.0
        %1145 = vmatpush1.msra.mxu0 0.0
        %1146 = vmatprep.mubr.f32.mxu0 0.0
        %1147 = vmatmul.mubr.f32.gmra.mrb[0].mxu0 %v1077
        %v1148 = vpop.f32.mrb[0].mxu0
        %v1149 = vadd.f32 0.0, %v1148
        %v1150 = vpop.f32.mrb[0].mxu0
        %v1151 = vadd.f32 0.0, %v1150
        %1152 = vmatprep.mubr.f32.mxu0 0.0
        %1153 = vmatmul.mubr.f32.gmra.mrb[0].mxu0 %v1080
        %v1154 = vpop.f32.mrb[0].mxu0
        %v1155 = vadd.f32 0.0, %v1154
        %v1156 = vpop.f32.mrb[0].mxu0
        %v1157 = vadd.f32 0.0, %v1156
        %1158 = vdwg.mxu0
        %v1159 = vadd.f32 %v1069, %v1149
        %v1160 = vadd.f32 %v1070, %v1151
        %v1161 = vadd.f32 %v1071, %v1155
        %v1162 = vadd.f32 %v1072, %v1157
        %1163 = vrot.lane.b32.xlu0 %v574, 96
        %v1164 = vpop.permute.xlu0 %1163
        %1165 = vrot.lane.b32.xlu0 %v575, 96
        %v1166 = vpop.permute.xlu0 %1165
        %1167 = vrot.lane.b32.xlu0 %v576, 96
        %v1168 = vpop.permute.xlu0 %1167
        %vm1169 = vcmp.lt.s32.totalorder %v553, 96
        %v1170 = vsel %vm1169, %v1166, %v1168
        %v1171 = vsel %vm1169, %v1164, %v1166
        %1172 = vrot.lane.b32.xlu0 %v539, 96
        %v1173 = vpop.permute.xlu0 %1172
        %1174 = vrot.lane.b32.xlu0 %v531, 96
        %v1175 = vpop.permute.xlu0 %1174
        %1176 = vrot.lane.b32.xlu0 %v542, 96
        %v1177 = vpop.permute.xlu0 %1176
        %v1178 = vsel %vm1169, %v1175, %v1177
        %v1179 = vsel %vm1169, %v1173, %v1175
        %1180 = vrot.lane.b32.xlu0 %v603, 96
        %v1181 = vpop.permute.xlu0 %1180
        %1182 = vrot.lane.b32.xlu0 %v604, 96
        %v1183 = vpop.permute.xlu0 %1182
        %1184 = vrot.lane.b32.xlu0 %v605, 96
        %v1185 = vpop.permute.xlu0 %1184
        %v1186 = vsel %vm1169, %v1183, %v1185
        %v1187 = vsel %vm1169, %v1181, %v1183
        %s1188 = scalar_lea.vmem %s403, 96 [#allocation2]
        %v1189 = vld [vmem:[%s1188] sm:$0xff]
        %v1190 = vld [vmem:[%s1188 + $0x8] sm:$0xff]
        %v1192 = vsel %vm611, %v1189, 0
        %v1195 = vsel %vm611, %v1190, 0
        %1197 = vmatprep.subr.mxu0 %v1170
        %1198 = vmatpush1.msra.mxu0 %v1171
        %1199 = vmatprep.subr.mxu0 0.0
        %1200 = vmatpush1.msra.mxu0 0.0
        %1201 = vmatprep.subr.mxu0 0.0
        %1202 = vmatpush1.msra.mxu0 0.0
        %1203 = vmatprep.subr.mxu0 0.0
        %1204 = vmatpush1.msra.mxu0 0.0
        %1205 = vmatprep.subr.mxu0 0.0
        %1206 = vmatpush1.msra.mxu0 0.0
        %1207 = vmatprep.subr.mxu0 0.0
        %1208 = vmatpush1.msra.mxu0 0.0
        %1209 = vmatprep.subr.mxu0 0.0
        %1210 = vmatpush1.msra.mxu0 0.0
        %1211 = vmatprep.subr.mxu0 0.0
        %1212 = vmatpush1.msra.mxu0 0.0
        %1213 = vmatprep.subr.mxu0 0.0
        %1214 = vmatpush1.msra.mxu0 0.0
        %1215 = vmatprep.subr.mxu0 0.0
        %1216 = vmatpush1.msra.mxu0 0.0
        %1217 = vmatprep.subr.mxu0 0.0
        %1218 = vmatpush1.msra.mxu0 0.0
        %1219 = vmatprep.subr.mxu0 0.0
        %1220 = vmatpush1.msra.mxu0 0.0
        %1221 = vmatprep.subr.mxu0 0.0
        %1222 = vmatpush1.msra.mxu0 0.0
        %1223 = vmatprep.subr.mxu0 0.0
        %1224 = vmatpush1.msra.mxu0 0.0
        %1225 = vmatprep.subr.mxu0 0.0
        %1226 = vmatpush1.msra.mxu0 0.0
        %1227 = vmatprep.subr.mxu0 0.0
        %1228 = vmatpush1.msra.mxu0 0.0
        %1229 = vmatprep.subr.mxu0 0.0
        %1230 = vmatpush1.msra.mxu0 0.0
        %1231 = vmatprep.subr.mxu0 0.0
        %1232 = vmatpush1.msra.mxu0 0.0
        %1233 = vmatprep.subr.mxu0 0.0
        %1234 = vmatpush1.msra.mxu0 0.0
        %1235 = vmatprep.subr.mxu0 0.0
        %1236 = vmatpush1.msra.mxu0 0.0
        %1237 = vmatprep.subr.mxu0 0.0
        %1238 = vmatpush1.msra.mxu0 0.0
        %1239 = vmatprep.subr.mxu0 0.0
        %1240 = vmatpush1.msra.mxu0 0.0
        %1241 = vmatprep.subr.mxu0 0.0
        %1242 = vmatpush1.msra.mxu0 0.0
        %1243 = vmatprep.subr.mxu0 0.0
        %1244 = vmatpush1.msra.mxu0 0.0
        %1245 = vmatprep.subr.mxu0 0.0
        %1246 = vmatpush1.msra.mxu0 0.0
        %1247 = vmatprep.subr.mxu0 0.0
        %1248 = vmatpush1.msra.mxu0 0.0
        %1249 = vmatprep.subr.mxu0 0.0
        %1250 = vmatpush1.msra.mxu0 0.0
        %1251 = vmatprep.subr.mxu0 0.0
        %1252 = vmatpush1.msra.mxu0 0.0
        %1253 = vmatprep.subr.mxu0 0.0
        %1254 = vmatpush1.msra.mxu0 0.0
        %1255 = vmatprep.subr.mxu0 0.0
        %1256 = vmatpush1.msra.mxu0 0.0
        %1257 = vmatprep.subr.mxu0 0.0
        %1258 = vmatpush1.msra.mxu0 0.0
        %1259 = vmatprep.subr.mxu0 0.0
        %1260 = vmatpush1.msra.mxu0 0.0
        %1261 = vmatprep.mubr.f32.mxu0 0.0
        %1262 = vmatmul.mubr.f32.gmra.mrb[0].mxu0 %v1192
        %v1263 = vpop.f32.mrb[0].mxu0
        %v1264 = vadd.f32 0.0, %v1263
        %v1265 = vpop.f32.mrb[0].mxu0
        %v1266 = vadd.f32 0.0, %v1265
        %1267 = vmatprep.mubr.f32.mxu0 0.0
        %1268 = vmatmul.mubr.f32.gmra.mrb[0].mxu0 %v1195
        %v1269 = vpop.f32.mrb[0].mxu0
        %v1270 = vadd.f32 0.0, %v1269
        %v1271 = vpop.f32.mrb[0].mxu0
        %v1272 = vadd.f32 0.0, %v1271
        %1273 = vdwg.mxu0
        %v1274 = vadd.f32 %v1159, %v1264
        %v1275 = vadd.f32 %v1160, %v1266
        %v1276 = vadd.f32 %v1161, %v1270
        %v1277 = vadd.f32 %v1162, %v1272
        %s1278 = scalar_lea.vmem %s403, 112 [#allocation2]
        %v1279 = vld [vmem:[%s1278] sm:$0xff]
        %v1280 = vld [vmem:[%s1278 + $0x8] sm:$0xff]
        %v1282 = vsel %vm611, %v1279, 0
        %v1285 = vsel %vm611, %v1280, 0
        %1287 = vmatprep.subr.mxu0 %v1178
        %1288 = vmatpush1.msra.mxu0 %v1179
        %1289 = vmatprep.subr.mxu0 0.0
        %1290 = vmatpush1.msra.mxu0 0.0
        %1291 = vmatprep.subr.mxu0 0.0
        %1292 = vmatpush1.msra.mxu0 0.0
        %1293 = vmatprep.subr.mxu0 0.0
        %1294 = vmatpush1.msra.mxu0 0.0
        %1295 = vmatprep.subr.mxu0 0.0
        %1296 = vmatpush1.msra.mxu0 0.0
        %1297 = vmatprep.subr.mxu0 0.0
        %1298 = vmatpush1.msra.mxu0 0.0
        %1299 = vmatprep.subr.mxu0 0.0
        %1300 = vmatpush1.msra.mxu0 0.0
        %1301 = vmatprep.subr.mxu0 0.0
        %1302 = vmatpush1.msra.mxu0 0.0
        %1303 = vmatprep.subr.mxu0 0.0
        %1304 = vmatpush1.msra.mxu0 0.0
        %1305 = vmatprep.subr.mxu0 0.0
        %1306 = vmatpush1.msra.mxu0 0.0
        %1307 = vmatprep.subr.mxu0 0.0
        %1308 = vmatpush1.msra.mxu0 0.0
        %1309 = vmatprep.subr.mxu0 0.0
        %1310 = vmatpush1.msra.mxu0 0.0
        %1311 = vmatprep.subr.mxu0 0.0
        %1312 = vmatpush1.msra.mxu0 0.0
        %1313 = vmatprep.subr.mxu0 0.0
        %1314 = vmatpush1.msra.mxu0 0.0
        %1315 = vmatprep.subr.mxu0 0.0
        %1316 = vmatpush1.msra.mxu0 0.0
        %1317 = vmatprep.subr.mxu0 0.0
        %1318 = vmatpush1.msra.mxu0 0.0
        %1319 = vmatprep.subr.mxu0 0.0
        %1320 = vmatpush1.msra.mxu0 0.0
        %1321 = vmatprep.subr.mxu0 0.0
        %1322 = vmatpush1.msra.mxu0 0.0
        %1323 = vmatprep.subr.mxu0 0.0
        %1324 = vmatpush1.msra.mxu0 0.0
        %1325 = vmatprep.subr.mxu0 0.0
        %1326 = vmatpush1.msra.mxu0 0.0
        %1327 = vmatprep.subr.mxu0 0.0
        %1328 = vmatpush1.msra.mxu0 0.0
        %1329 = vmatprep.subr.mxu0 0.0
        %1330 = vmatpush1.msra.mxu0 0.0
        %1331 = vmatprep.subr.mxu0 0.0
        %1332 = vmatpush1.msra.mxu0 0.0
        %1333 = vmatprep.subr.mxu0 0.0
        %1334 = vmatpush1.msra.mxu0 0.0
        %1335 = vmatprep.subr.mxu0 0.0
        %1336 = vmatpush1.msra.mxu0 0.0
        %1337 = vmatprep.subr.mxu0 0.0
        %1338 = vmatpush1.msra.mxu0 0.0
        %1339 = vmatprep.subr.mxu0 0.0
        %1340 = vmatpush1.msra.mxu0 0.0
        %1341 = vmatprep.subr.mxu0 0.0
        %1342 = vmatpush1.msra.mxu0 0.0
        %1343 = vmatprep.subr.mxu0 0.0
        %1344 = vmatpush1.msra.mxu0 0.0
        %1345 = vmatprep.subr.mxu0 0.0
        %1346 = vmatpush1.msra.mxu0 0.0
        %1347 = vmatprep.subr.mxu0 0.0
        %1348 = vmatpush1.msra.mxu0 0.0
        %1349 = vmatprep.subr.mxu0 0.0
        %1350 = vmatpush1.msra.mxu0 0.0
        %1351 = vmatprep.mubr.f32.mxu0 0.0
        %1352 = vmatmul.mubr.f32.gmra.mrb[0].mxu0 %v1282
        %v1353 = vpop.f32.mrb[0].mxu0
        %v1354 = vadd.f32 0.0, %v1353
        %v1355 = vpop.f32.mrb[0].mxu0
        %v1356 = vadd.f32 0.0, %v1355
        %1357 = vmatprep.mubr.f32.mxu0 0.0
        %1358 = vmatmul.mubr.f32.gmra.mrb[0].mxu0 %v1285
        %v1359 = vpop.f32.mrb[0].mxu0
        %v1360 = vadd.f32 0.0, %v1359
        %v1361 = vpop.f32.mrb[0].mxu0
        %v1362 = vadd.f32 0.0, %v1361
        %1363 = vdwg.mxu0
        %v1364 = vadd.f32 %v1274, %v1354
        %v1365 = vadd.f32 %v1275, %v1356
        %v1366 = vadd.f32 %v1276, %v1360
        %v1367 = vadd.f32 %v1277, %v1362
        %s1368 = scalar_lea.vmem %s403, 128 [#allocation2]
        %v1369 = vld [vmem:[%s1368] sm:$0xff]
        %v1370 = vld [vmem:[%s1368 + $0x8] sm:$0xff]
        %v1372 = vsel %vm611, %v1369, 0
        %v1375 = vsel %vm611, %v1370, 0
        %1377 = vmatprep.subr.mxu0 %v1186
        %1378 = vmatpush1.msra.mxu0 %v1187
        %1379 = vmatprep.subr.mxu0 0.0
        %1380 = vmatpush1.msra.mxu0 0.0
        %1381 = vmatprep.subr.mxu0 0.0
        %1382 = vmatpush1.msra.mxu0 0.0
        %1383 = vmatprep.subr.mxu0 0.0
        %1384 = vmatpush1.msra.mxu0 0.0
        %1385 = vmatprep.subr.mxu0 0.0
        %1386 = vmatpush1.msra.mxu0 0.0
        %1387 = vmatprep.subr.mxu0 0.0
        %1388 = vmatpush1.msra.mxu0 0.0
        %1389 = vmatprep.subr.mxu0 0.0
        %1390 = vmatpush1.msra.mxu0 0.0
        %1391 = vmatprep.subr.mxu0 0.0
        %1392 = vmatpush1.msra.mxu0 0.0
        %1393 = vmatprep.subr.mxu0 0.0
        %1394 = vmatpush1.msra.mxu0 0.0
        %1395 = vmatprep.subr.mxu0 0.0
        %1396 = vmatpush1.msra.mxu0 0.0
        %1397 = vmatprep.subr.mxu0 0.0
        %1398 = vmatpush1.msra.mxu0 0.0
        %1399 = vmatprep.subr.mxu0 0.0
        %1400 = vmatpush1.msra.mxu0 0.0
        %1401 = vmatprep.subr.mxu0 0.0
        %1402 = vmatpush1.msra.mxu0 0.0
        %1403 = vmatprep.subr.mxu0 0.0
        %1404 = vmatpush1.msra.mxu0 0.0
        %1405 = vmatprep.subr.mxu0 0.0
        %1406 = vmatpush1.msra.mxu0 0.0
        %1407 = vmatprep.subr.mxu0 0.0
        %1408 = vmatpush1.msra.mxu0 0.0
        %1409 = vmatprep.subr.mxu0 0.0
        %1410 = vmatpush1.msra.mxu0 0.0
        %1411 = vmatprep.subr.mxu0 0.0
        %1412 = vmatpush1.msra.mxu0 0.0
        %1413 = vmatprep.subr.mxu0 0.0
        %1414 = vmatpush1.msra.mxu0 0.0
        %1415 = vmatprep.subr.mxu0 0.0
        %1416 = vmatpush1.msra.mxu0 0.0
        %1417 = vmatprep.subr.mxu0 0.0
        %1418 = vmatpush1.msra.mxu0 0.0
        %1419 = vmatprep.subr.mxu0 0.0
        %1420 = vmatpush1.msra.mxu0 0.0
        %1421 = vmatprep.subr.mxu0 0.0
        %1422 = vmatpush1.msra.mxu0 0.0
        %1423 = vmatprep.subr.mxu0 0.0
        %1424 = vmatpush1.msra.mxu0 0.0
        %1425 = vmatprep.subr.mxu0 0.0
        %1426 = vmatpush1.msra.mxu0 0.0
        %1427 = vmatprep.subr.mxu0 0.0
        %1428 = vmatpush1.msra.mxu0 0.0
        %1429 = vmatprep.subr.mxu0 0.0
        %1430 = vmatpush1.msra.mxu0 0.0
        %1431 = vmatprep.subr.mxu0 0.0
        %1432 = vmatpush1.msra.mxu0 0.0
        %1433 = vmatprep.subr.mxu0 0.0
        %1434 = vmatpush1.msra.mxu0 0.0
        %1435 = vmatprep.subr.mxu0 0.0
        %1436 = vmatpush1.msra.mxu0 0.0
        %1437 = vmatprep.subr.mxu0 0.0
        %1438 = vmatpush1.msra.mxu0 0.0
        %1439 = vmatprep.subr.mxu0 0.0
        %1440 = vmatpush1.msra.mxu0 0.0
        %1441 = vmatprep.mubr.f32.mxu0 0.0
        %1442 = vmatmul.mubr.f32.gmra.mrb[0].mxu0 %v1372
        %v1443 = vpop.f32.mrb[0].mxu0
        %v1444 = vadd.f32 0.0, %v1443
        %v1445 = vpop.f32.mrb[0].mxu0
        %v1446 = vadd.f32 0.0, %v1445
        %1447 = vmatprep.mubr.f32.mxu0 0.0
        %1448 = vmatmul.mubr.f32.gmra.mrb[0].mxu0 %v1375
        %v1449 = vpop.f32.mrb[0].mxu0
        %v1450 = vadd.f32 0.0, %v1449
        %v1451 = vpop.f32.mrb[0].mxu0
        %v1452 = vadd.f32 0.0, %v1451
        %1453 = vdwg.mxu0
        %v1454 = vadd.f32 %v1364, %v1444
        %v1455 = vadd.f32 %v1365, %v1446
        %v1456 = vadd.f32 %v1366, %v1450
        %v1457 = vadd.f32 %v1367, %v1452
        %1458 = vst [vmem:[%s460] sm:$0xff] %v1454
        %1459 = vst [vmem:[%s460 + $0x8] sm:$0xff] %v1455
        %1460 = vst [vmem:[%s460 + $0x10] sm:$0xff] %v1456
        %1461 = vst [vmem:[%s460 + $0x18] sm:$0xff] %v1457
        %s1462 = sand.u32 %s197, 1
        %s1463 = scalar_lea.sflag [#allocation4], %s1462
        %s1464 = sand.u32 %s197, 1
        %s1465 = smul.addr %s1464, 32
        %s1466 = scalar_lea.vmem [#allocation3], %s1465
        // Predicated region
        $region79: #{tpu_custom_call.1} parent=73 // pred_check
          %p1467 = pneg %p207
        $region80: #{tpu_custom_call.1} parent=73 // pred_check_branch
          %1469 = sbr.rel (%p1467) target = $region82
        $region81: #{tpu_custom_call.1} parent=73 // pred_region
          %s1470 = smul.u32 2, %s26
          %s1471 = smul.u32 2, %s25
          %s1473 = ssub.s32 512, 512
          %1474 = vsyncadd %s1463, %s1473
          %s1475 = smul.addr %s1470, 2
          %s1476 = sadd.s32 %s1471, %s1475
          %s1477 = smul.addr %s24, 8
          %s1478 = sadd.s32 %s1476, %s1477
          %s1479 = smul.addr %s1478, 128
          %s1480 = scalar_lea.hbm %s5, %s1479
          %s1481 = sshll.u32 %s1466, 4
          %s1482 = int_to_ptr.vmem [resolvable:$true] %s1481
          %1487 = dma.vmem_to_hbm [thread:$0]  %s1482, 512, %s1480, %s1463, 256, 256, 16
        $region82: #{tpu_custom_call.1} parent=73 // pred_fallthru
          _
      $region74: #{tpu_custom_call.1} parent=5 // pred_fallthru
        _
      %p1488 = scmp.le.s32.totalorder 2, %s14
      // Predicated region
      $region83: #{tpu_custom_call.1} parent=5 // pred_check
        %p1489 = pneg %p1488
      $region84: #{tpu_custom_call.1} parent=5 // pred_check_branch
        %1491 = sbr.rel (%p1489) target = $region86
      $region85: #{tpu_custom_call.1} parent=5 // pred_region
        %s1492 = ssub.s32 %s14, 2
        // Predicated region
        $region87: #{tpu_custom_call.1} parent=85 // pred_check
          %p1493 = pneg %p213
        $region88: #{tpu_custom_call.1} parent=85 // pred_check_branch
          %1495 = sbr.rel (%p1493) target = $region90
        $region89: #{tpu_custom_call.1} parent=85 // pred_region
          %s1496 = sand.u32 %s198, 1
          %s1497 = scalar_lea.sflag [#allocation4], %s1496
          %s1498 = sand.u32 %s198, 1
          %s1499 = smul.addr %s1498, 32
          %s1500 = scalar_lea.vmem [#allocation3], %s1499
          %1501 = dma.done %s1497, 512
        $region90: #{tpu_custom_call.1} parent=85 // pred_fallthru
          _
      $region86: #{tpu_custom_call.1} parent=5 // pred_fallthru
        _
    $region6: #{tpu_custom_call.1} parent=1 // loop_footer
      %s18 = sadd.s32 1, %s14
    $region7: #{tpu_custom_call.1} parent=1 // loop_footer_branch
      %13 = sbr.rel target = $region3
    $region8: #{tpu_custom_call.1} parent=1 // loop_exit
      _
    %1502 = vsyncpa [#allocation4], 1
    %s1503 = scalar_lea.sflag [#allocation4], 1
    %1504 = vsyncpa %s1503, 1

</llo_original>
